<compile_context>
chip_gen: v6e
topology: v6e:2x2x1
jax: 0.10.0
libtpu: 0.0.40
codegen_flags: <defaults>
</compile_context>

<pallas_src>
import jax
import jax.numpy as jnp
from jax.experimental import pallas as pl
from jax.experimental.pallas import tpu as pltpu


# --------------------------------------------------------------------------- #
# Helpers / packed parameter layout
# --------------------------------------------------------------------------- #
def _round_up(v, m):
    return -(-v // m) * m


def _layout(d_in_p, d_edge_p, hp):
    """Column offsets of each segment inside the packed [HP+8, C] buffer."""
    cols = {}
    c = 0
    cols["wn"] = c; c += d_in_p          # Wn^T   [HP, d_in_p]
    cols["we"] = c; c += d_edge_p        # We^T   [HP, d_edge_p]
    cols["w1"] = c; c += 3 * hp          # W1^T   [HP, 3*HP] (merged attention)
    cols["wo"] = c; c += hp              # Wo     [HP, HP]   (+ row vecs below)
    cols["col"] = c; c += 128            # column vectors: bn, be, b1, w2
    return cols, hp + 8, c               # (cols, n_rows, n_cols)


def _pack_params(p, has_edge, H, HP, d_in, d_edge, cols, n_rows, n_cols):
    """Pack one edge type's params into a single [HP+8, C] float32 buffer."""
    if has_edge:
        W1, b1, w2, b2 = p["W1e"], p["b1e"], p["w2e"], p["b2e"]   # W1: [3H, H]
    else:
        W1, b1, w2, b2 = p["W1"], p["b1"], p["w2"], p["b2"]       # W1: [2H, H]

    buf = jnp.zeros((n_rows, n_cols), jnp.float32)
    buf = buf.at[0:H, cols["wn"]:cols["wn"] + d_in].set(p["Wn"].T)
    buf = buf.at[0:H, cols["we"]:cols["we"] + d_edge].set(p["We"].T)
    c1 = cols["w1"]
    buf = buf.at[0:H, c1:c1 + H].set(W1[0:H].T)                   # h_src chunk
    buf = buf.at[0:H, c1 + HP:c1 + HP + H].set(W1[H:2 * H].T)     # h_dst chunk
    if has_edge:                                                  # edge chunk
        buf = buf.at[0:H, c1 + 2 * HP:c1 + 2 * HP + H].set(W1[2 * H:3 * H].T)
    cw = cols["wo"]
    buf = buf.at[0:H, cw:cw + H].set(p["Wo"])
    cc = cols["col"]
    buf = buf.at[0:H, cc + 0:cc + 1].set(p["bn"].T)
    buf = buf.at[0:H, cc + 1:cc + 2].set(p["be"].T)
    buf = buf.at[0:H, cc + 2:cc + 3].set(b1.T)
    buf = buf.at[0:H, cc + 3:cc + 4].set(w2)
    buf = buf.at[HP + 0, cw:cw + H].set(p["bo"][0])
    buf = buf.at[HP + 1, cw:cw + H].set(p["gamma"][0])
    buf = buf.at[HP + 2, cw:cw + H].set(p["beta"][0])
    buf = buf.at[HP + 3, cw].set(b2[0, 0])
    return buf


# --------------------------------------------------------------------------- #
# Fused Pallas kernel: grid = (edge_type [parallel], edge_tile [arbitrary])
# --------------------------------------------------------------------------- #
def _make_kernel(num_nodes, H, HP, d_in_p, d_edge_p, e_tile, cols):
    c_wn, c_we, c_w1 = cols["wn"], cols["we"], cols["w1"]
    c_wo, c_col = cols["wo"], cols["col"]
    inv_h = 1.0 / float(H)

    def kernel(cnt_ref, xT_ref, idx_ref, efT_ref, prm_ref, out_ref,
               hT_scr, acc_scr):
        t = pl.program_id(0)
        k = pl.program_id(1)
        last_k = pl.num_programs(1) - 1

        # small packed vectors (cheap loads, shared by all phases)
        colv = prm_ref[0:HP, c_col:c_col + 128]           # [HP, 128]
        bn_col, be_col = colv[:, 0:1], colv[:, 1:2]
        b1_col, w2_col = colv[:, 2:3], colv[:, 3:4]
        rowv = prm_ref[HP:HP + 8, c_wo:c_wo + HP]         # [8, HP]
        bo, gamma, beta = rowv[0:1], rowv[1:2], rowv[2:3]
        b2 = rowv[3:4, 0:1]                               # [1, 1]

        # ---- per-type init: node transform once + zero accumulator -------
        @pl.when(k == 0)
        def _():
            WnT = prm_ref[0:HP, c_wn:c_wn + d_in_p]                 # [HP, Din]
            hT_scr[...] = (jnp.dot(WnT, xT_ref[...],
                                   preferred_element_type=jnp.float32)
                           + bn_col)                                # [HP, N]
            acc_scr[...] = jnp.zeros_like(acc_scr)

        # ---- edge-tile compute; skip tiles that are entirely padding ------
        @pl.when(k * e_tile < cnt_ref[t])
        def _():
            hT = hT_scr[...]                                        # [HP, N]
            src = idx_ref[0:1, :]                                   # [1, E]
            dst = idx_ref[1:2, :]                                   # [1, E]
            node_iota = jax.lax.broadcasted_iota(
                jnp.int32, (num_nodes, e_tile), 0)
            # padded edges carry src = dst = -1 -> all-zero one-hot columns
            src_oh = (node_iota == src).astype(jnp.float32)         # [N, E]
            dst_oh = (node_iota == dst).astype(jnp.float32)         # [N, E]

            # gathers as standard dots against transposed node features
            h_srcT = jnp.dot(hT, src_oh, preferred_element_type=jnp.float32)
            h_dstT = jnp.dot(hT, dst_oh, preferred_element_type=jnp.float32)

            # edge-feature transform (W1 edge-chunk is zero for types w/o it)
            WeT = prm_ref[0:HP, c_we:c_we + d_edge_p]
            efT = (jnp.dot(WeT, efT_ref[...],
                           preferred_element_type=jnp.float32) + be_col)

            # merged attention MLP: one 3*HP-deep contraction on the MXU
            W1T = prm_ref[0:HP, c_w1:c_w1 + 3 * HP]                 # [HP, 3HP]
            catT = jnp.concatenate([h_srcT, h_dstT, efT], axis=0)   # [3HP, E]
            preT = (jnp.dot(W1T, catT, preferred_element_type=jnp.float32)
                    + b1_col)                                       # [HP, E]
            att = jnp.sum(jnp.tanh(preT) * w2_col, axis=0,
                          keepdims=True) + b2                       # [1, E]
            # TODO(synk): plain exp matches the PyTorch module (no per-segment
            #             max subtraction); huge logits would need a max pass.
            att_exp = jnp.exp(att)

            # fused numerator + denominator scatter: sublane H carries denom
            sub_iota = jax.lax.broadcasted_iota(jnp.int32, (HP, e_tile), 0)
            payT = jnp.where(sub_iota == H, att_exp, h_dstT * att_exp)
            acc_scr[...] += jax.lax.dot_general(
                src_oh, payT, dimension_numbers=(((1,), (1,)), ((), ())),
                preferred_element_type=jnp.float32)                 # [N, HP]

        # ---- epilogue at the last edge tile --------------------------------
        @pl.when(k == last_k)
        def _():
            acc = acc_scr[...]                                      # [N, HP]
            denom = acc[:, H:H + 1]
            denom = jnp.where(denom > 0.0, denom, 1.0)              # isolated
            agg = acc * pl.reciprocal(denom, approx=True)
            Wo = prm_ref[0:HP, c_wo:c_wo + HP]                      # [HP, HP]
            y = jnp.dot(agg, Wo, preferred_element_type=jnp.float32) + bo
            # single-pass LayerNorm stats over the real H lanes (pad lanes = 0)
            mean = jnp.sum(y, axis=-1, keepdims=True) * inv_h
            msq = jnp.sum(y * y, axis=-1, keepdims=True) * inv_h
            var = msq - mean * mean
            y = (y - mean) * jax.lax.rsqrt(var + 1e-5)
            y = jnp.maximum(y * gamma + beta, 0.0)
            # TODO(synk): attention / output dropout are stochastic; eval-mode
            #             identity here.
            out_ref[...] = y[:, :H]

    return kernel


# --------------------------------------------------------------------------- #
# Wrapper: fuse all present edge types into one gridded pallas_call
# --------------------------------------------------------------------------- #
def node_level_attention_forward(node_features, edge_indices_dict,
                                 edge_features_dict, params, edge_types,
                                 hidden_dim):
    """Forward pass matching NodeLevelAttention.forward (eval mode)."""
    node_features = jnp.asarray(node_features, jnp.float32)
    num_nodes, d_in = node_features.shape
    H = hidden_dim
    HP = _round_up(H + 1, 128)            # spare sublane at index H = denom
    d_in_p = _round_up(d_in, 128)

    out = {}
    present = [et for et in edge_types if et in edge_indices_dict]
    for et in edge_types:
        if et not in edge_indices_dict:
            out[et] = jnp.zeros((num_nodes, H), jnp.float32)
    if not present:
        return out

    d_edge = params[present[0]]["We"].shape[0]
    d_edge_p = _round_up(d_edge, 128)
    cols, n_rows, n_cols = _layout(d_in_p, d_edge_p, HP)

    e_max = max(max(int(edge_indices_dict[et].shape[1]) for et in present), 1)
    e_tile = min(512, _round_up(e_max, 128))   # fits v7x 64 MiB / v6e 128 MiB
    e_pad = _round_up(e_max, e_tile)
    n_k = e_pad // e_tile

    # transposed node features, padded to the aligned contraction depth
    xT = jnp.zeros((d_in_p, num_nodes), jnp.float32)
    xT = xT.at[:d_in, :].set(node_features.T)

    idx_all, ef_all, prm_all, cnt_all = [], [], [], []
    for et in present:
        ei = jnp.asarray(edge_indices_dict[et], jnp.int32)        # [2, e]
        e = int(ei.shape[1])
        idx = jnp.full((2, e_pad), -1, jnp.int32)                 # lane-dense
        idx = idx.at[:, :e].set(ei)
        has_edge = (edge_features_dict is not None
                    and et in edge_features_dict)
        efT = jnp.zeros((d_edge_p, e_pad), jnp.float32)
        if has_edge:
            efT = efT.at[:d_edge, :e].set(
                jnp.asarray(edge_features_dict[et], jnp.float32).T)
        idx_all.append(idx)
        ef_all.append(efT)
        cnt_all.append(e)
        prm_all.append(_pack_params(params[et], has_edge, H, HP,
                                    d_in, d_edge, cols, n_rows, n_cols))

    idx_all = jnp.stack(idx_all)                    # [T, 2, E_pad]
    ef_all = jnp.stack(ef_all)                      # [T, D_edge_p, E_pad]
    prm_all = jnp.stack(prm_all)                    # [T, HP+8, C]
    cnt_all = jnp.asarray(cnt_all, jnp.int32)       # [T]
    t = len(present)

    kernel = _make_kernel(num_nodes, H, HP, d_in_p, d_edge_p, e_tile, cols)
    y = pl.pallas_call(
        kernel,
        out_shape=jax.ShapeDtypeStruct((t, num_nodes, H), jnp.float32),
        grid_spec=pltpu.PrefetchScalarGridSpec(
            num_scalar_prefetch=1,
            grid=(t, n_k),
            in_specs=[
                pl.BlockSpec((d_in_p, num_nodes), lambda i, k, c: (0, 0)),
                pl.BlockSpec((None, 2, e_tile), lambda i, k, c: (i, 0, k)),
                pl.BlockSpec((None, d_edge_p, e_tile),
                             lambda i, k, c: (i, 0, k)),
                pl.BlockSpec((None, n_rows, n_cols),
                             lambda i, k, c: (i, 0, 0)),
            ],
            out_specs=pl.BlockSpec((None, num_nodes, H),
                                   lambda i, k, c: (i, 0, 0)),
            scratch_shapes=[pltpu.VMEM((HP, num_nodes), jnp.float32),
                            pltpu.VMEM((num_nodes, HP), jnp.float32)],
        ),
        compiler_params=pltpu.CompilerParams(
            dimension_semantics=("parallel", "arbitrary"),
            vmem_limit_bytes=64 * 1024 * 1024),
    )(cnt_all, xT, idx_all, ef_all, prm_all)

    for i, et in enumerate(present):
        out[et] = y[i]
    return out


# --------------------------------------------------------------------------- #
# Pure-JAX reference (for correctness checking only)
# --------------------------------------------------------------------------- #
def reference_forward(node_features, edge_indices_dict, edge_features_dict,
                      params, edge_types, hidden_dim):
    num_nodes = node_features.shape[0]
    out = {}
    for et in edge_types:
        if et not in edge_indices_dict:
            out[et] = jnp.zeros((num_nodes, hidden_dim), jnp.float32)
            continue
        p = params[et]
        src, dst = edge_indices_dict[et][0], edge_indices_dict[et][1]
        h = node_features @ p["Wn"] + p["bn"]
        h_src, h_dst = h[src], h[dst]
        if edge_features_dict is not None and et in edge_features_dict:
            ef = edge_features_dict[et] @ p["We"] + p["be"]
            cat = jnp.concatenate([h_src, h_dst, ef], axis=1)
            att = jnp.tanh(cat @ p["W1e"] + p["b1e"]) @ p["w2e"] + p["b2e"]
        else:
            cat = jnp.concatenate([h_src, h_dst], axis=1)
            att = jnp.tanh(cat @ p["W1"] + p["b1"]) @ p["w2"] + p["b2"]
        att_exp = jnp.exp(att)
        denom = jnp.zeros((num_nodes, 1), jnp.float32).at[src].add(att_exp)
        alpha = att_exp / denom[src]
        agg = jnp.zeros((num_nodes, hidden_dim),
                        jnp.float32).at[src].add(h_dst * alpha)
        y = agg @ p["Wo"] + p["bo"]
        mean = y.mean(-1, keepdims=True)
        var = ((y - mean) ** 2).mean(-1, keepdims=True)
        y = (y - mean) / jnp.sqrt(var + 1e-5) * p["gamma"] + p["beta"]
        out[et] = jnp.maximum(y, 0.0)
    return out


# --------------------------------------------------------------------------- #
# Deterministic parameter init (shapes follow the torch module's __init__)
# --------------------------------------------------------------------------- #
def init_params(key, edge_types, input_dim, edge_dim, hidden_dim):
    def lin_w(k, fan_in, fan_out):
        return jax.random.normal(k, (fan_in, fan_out),
                                 jnp.float32) / jnp.sqrt(fan_in)

    def lin_b(k, fan_out):
        return jax.random.normal(k, (1, fan_out), jnp.float32) * 0.01

    params = {}
    for i, et in enumerate(edge_types):
        ks = jax.random.split(jax.random.fold_in(key, i), 14)
        params[et] = dict(
            Wn=lin_w(ks[0], input_dim, hidden_dim),  bn=lin_b(ks[1], hidden_dim),
            We=lin_w(ks[2], edge_dim, hidden_dim),   be=lin_b(ks[3], hidden_dim),
            W1e=lin_w(ks[4], 3 * hidden_dim, hidden_dim), b1e=lin_b(ks[5], hidden_dim),
            w2e=lin_w(ks[6], hidden_dim, 1),         b2e=lin_b(ks[7], 1),
            W1=lin_w(ks[8], 2 * hidden_dim, hidden_dim),  b1=lin_b(ks[9], hidden_dim),
            w2=lin_w(ks[10], hidden_dim, 1),         b2=lin_b(ks[11], 1),
            Wo=lin_w(ks[12], hidden_dim, hidden_dim), bo=lin_b(ks[13], hidden_dim),
            gamma=jnp.ones((1, hidden_dim), jnp.float32),
            beta=jnp.zeros((1, hidden_dim), jnp.float32),
        )
    return params


# --------------------------------------------------------------------------- #
if __name__ == "__main__":
    N, D_IN, D_EDGE, HID = 8, 16, 8, 32
    EDGE_TYPES = ["cites", "links", "unused"]

    key = jax.random.PRNGKey(0)
    k_x, k_p, k_e1, k_e2, k_ef = jax.random.split(key, 5)

    node_features = jax.random.normal(k_x, (N, D_IN), jnp.float32)

    # "cites": 16 edges, WITH edge features -> attention_mlp_with_edge path
    e1 = 16
    cites_idx = jax.random.randint(k_e1, (2, e1), 0, N, jnp.int32)
    cites_feat = jax.random.normal(k_ef, (e1, D_EDGE), jnp.float32)
    # "links": 12 edges, NO edge features -> attention_mlp path
    e2 = 12
    links_idx = jax.random.randint(k_e2, (2, e2), 0, N, jnp.int32)
    # "unused": missing from edge_indices_dict -> zeros fallback

    edge_indices_dict = {"cites": cites_idx, "links": links_idx}
    edge_features_dict = {"cites": cites_feat}

    params = init_params(k_p, EDGE_TYPES, D_IN, D_EDGE, HID)

    out = node_level_attention_forward(node_features, edge_indices_dict,
                                       edge_features_dict, params,
                                       EDGE_TYPES, HID)
    out = {k: jax.block_until_ready(v) for k, v in out.items()}

    ref = reference_forward(node_features, edge_indices_dict,
                            edge_features_dict, params, EDGE_TYPES, HID)
    for et in EDGE_TYPES:
        assert out[et].shape == (N, HID)
        assert jnp.allclose(out[et], ref[et], atol=1e-2, rtol=1e-2), \
            f"mismatch for {et}"

    print("KERNEL_OK")
</pallas_src>

<mosaic_0001>
module attributes {stable_mosaic.version = 11 : i64} {
  func.func @kernel(%arg0: i32, %arg1: i32, %arg2: memref<2xi32, #tpu.memory_space<smem>>, %arg3: memref<128x8xf32, #tpu.memory_space<vmem>>, %arg4: memref<1x2x128xi32, #tpu.memory_space<vmem>>, %arg5: memref<1x128x128xf32, #tpu.memory_space<vmem>>, %arg6: memref<1x136x896xf32, #tpu.memory_space<vmem>>, %arg7: memref<1x8x32xf32, #tpu.memory_space<vmem>>, %arg8: memref<128x8xf32, #tpu.memory_space<vmem>>, %arg9: memref<8x128xf32, #tpu.memory_space<vmem>>) attributes {dimension_semantics = [#tpu.dimension_semantics<parallel>, #tpu.dimension_semantics<arbitrary>], iteration_bounds = array<i64: 2, 1>, scalar_prefetch = 1 : i64, scratch_operands = 2 : i64, tpu.core_type = #tpu.core_type<tc>, window_params = [{pipeline_mode = #tpu.pipeline_mode<synchronous>, transform_indices = @transform_0, window_bounds = array<i64: 128, 8>}, {transform_indices = @transform_1, window_bounds = array<i64: 1, 2, 128>}, {transform_indices = @transform_2, window_bounds = array<i64: 1, 128, 128>}, {transform_indices = @transform_3, window_bounds = array<i64: 1, 136, 896>}, {transform_indices = @transform_4, window_bounds = array<i64: 1, 8, 32>}]} {
    %c0 = arith.constant 0 : index
    %c0_0 = arith.constant 0 : index
    %c768 = arith.constant 768 : index
    %0 = vector.load %arg6[%c0, %c0_0, %c768] : memref<1x136x896xf32, #tpu.memory_space<vmem>>, vector<1x128x128xf32>
    %1 = vector.shape_cast %0 : vector<1x128x128xf32> to vector<128x128xf32>
    %2 = vector.extract_strided_slice %1 {offsets = [0, 0], sizes = [128, 1], strides = [1, 1]} : vector<128x128xf32> to vector<128x1xf32>
    %3 = vector.extract_strided_slice %1 {offsets = [0, 1], sizes = [128, 1], strides = [1, 1]} : vector<128x128xf32> to vector<128x1xf32>
    %4 = vector.extract_strided_slice %1 {offsets = [0, 2], sizes = [128, 1], strides = [1, 1]} : vector<128x128xf32> to vector<128x1xf32>
    %5 = vector.extract_strided_slice %1 {offsets = [0, 3], sizes = [128, 1], strides = [1, 1]} : vector<128x128xf32> to vector<128x1xf32>
    %c0_1 = arith.constant 0 : index
    %c128 = arith.constant 128 : index
    %c640 = arith.constant 640 : index
    %6 = vector.load %arg6[%c0_1, %c128, %c640] : memref<1x136x896xf32, #tpu.memory_space<vmem>>, vector<1x8x128xf32>
    %7 = vector.shape_cast %6 : vector<1x8x128xf32> to vector<8x128xf32>
    %8 = vector.extract_strided_slice %7 {offsets = [0, 0], sizes = [1, 128], strides = [1, 1]} : vector<8x128xf32> to vector<1x128xf32>
    %9 = vector.extract_strided_slice %7 {offsets = [1, 0], sizes = [1, 128], strides = [1, 1]} : vector<8x128xf32> to vector<1x128xf32>
    %10 = vector.extract_strided_slice %7 {offsets = [2, 0], sizes = [1, 128], strides = [1, 1]} : vector<8x128xf32> to vector<1x128xf32>
    %11 = vector.extract_strided_slice %7 {offsets = [3, 0], sizes = [1, 1], strides = [1, 1]} : vector<8x128xf32> to vector<1x1xf32>
    %c0_i32 = arith.constant 0 : i32
    %12 = arith.cmpi eq, %arg1, %c0_i32 : i32
    %13 = arith.extui %12 : i1 to i32
    %c0_i32_2 = arith.constant 0 : i32
    %14 = arith.cmpi ne, %13, %c0_i32_2 : i32
    scf.if %14 {
      %c0_6 = arith.constant 0 : index
      %c0_7 = arith.constant 0 : index
      %c0_8 = arith.constant 0 : index
      %24 = vector.load %arg6[%c0_6, %c0_7, %c0_8] : memref<1x136x896xf32, #tpu.memory_space<vmem>>, vector<1x128x128xf32>
      %25 = vector.shape_cast %24 : vector<1x128x128xf32> to vector<128x128xf32>
      %c0_9 = arith.constant 0 : index
      %c0_10 = arith.constant 0 : index
      %26 = vector.load %arg3[%c0_9, %c0_10] : memref<128x8xf32, #tpu.memory_space<vmem>>, vector<128x8xf32>
      %cst = arith.constant dense<0.000000e+00> : vector<128x8xf32>
      %27 = tpu.matmul %25, %26, %cst {dimension_numbers = #tpu.dot_dimension_numbers<[1], [0], [0], [1], [0, 0, 1, 1], [], []>} : vector<128x128xf32>, vector<128x8xf32>, vector<128x8xf32> -> vector<128x8xf32>
      %28 = vector.broadcast %2 : vector<128x1xf32> to vector<128x8xf32>
      %29 = arith.addf %27, %28 : vector<128x8xf32>
      %c0_11 = arith.constant 0 : index
      %c0_12 = arith.constant 0 : index
      %30 = vector.load %arg8[%c0_11, %c0_12] : memref<128x8xf32, #tpu.memory_space<vmem>>, vector<128x8xf32>
      tpu.vector_store %arg8[%c0_11, %c0_12], %29 {strides = array<i32>} : memref<128x8xf32, #tpu.memory_space<vmem>>, vector<128x8xf32>,
      %cst_13 = arith.constant 0.000000e+00 : f32
      %31 = vector.broadcast %cst_13 : f32 to vector<8x128xf32>
      %c0_14 = arith.constant 0 : index
      %c0_15 = arith.constant 0 : index
      %32 = vector.load %arg9[%c0_14, %c0_15] : memref<8x128xf32, #tpu.memory_space<vmem>>, vector<8x128xf32>
      tpu.vector_store %arg9[%c0_14, %c0_15], %31 {strides = array<i32>} : memref<8x128xf32, #tpu.memory_space<vmem>>, vector<8x128xf32>,
    } else {
    }
    %c128_i32 = arith.constant 128 : i32
    %15 = arith.muli %arg1, %c128_i32 : i32
    %16 = arith.index_cast %arg0 : i32 to index
    %17 = memref.load %arg2[%16] : memref<2xi32, #tpu.memory_space<smem>>
    %18 = arith.cmpi slt, %15, %17 : i32
    %19 = arith.extui %18 : i1 to i32
    %c0_i32_3 = arith.constant 0 : i32
    %20 = arith.cmpi ne, %19, %c0_i32_3 : i32
    scf.if %20 {
      %c0_6 = arith.constant 0 : index
      %c0_7 = arith.constant 0 : index
      %24 = vector.load %arg8[%c0_6, %c0_7] : memref<128x8xf32, #tpu.memory_space<vmem>>, vector<128x8xf32>
      %c0_8 = arith.constant 0 : index
      %c0_9 = arith.constant 0 : index
      %c0_10 = arith.constant 0 : index
      %25 = vector.load %arg4[%c0_8, %c0_9, %c0_10] : memref<1x2x128xi32, #tpu.memory_space<vmem>>, vector<1x1x128xi32>
      %26 = vector.shape_cast %25 : vector<1x1x128xi32> to vector<1x128xi32>
      %c0_11 = arith.constant 0 : index
      %c1 = arith.constant 1 : index
      %c0_12 = arith.constant 0 : index
      %27 = vector.load %arg4[%c0_11, %c1, %c0_12] : memref<1x2x128xi32, #tpu.memory_space<vmem>>, vector<1x1x128xi32>
      %28 = vector.shape_cast %27 : vector<1x1x128xi32> to vector<1x128xi32>
      %29 = tpu.iota {dimensions = array<i32: 0>} : vector<8x128xi32>
      %30 = vector.broadcast %26 : vector<1x128xi32> to vector<8x128xi32>
      %31 = arith.cmpi eq, %29, %30 : vector<8x128xi32>
      %32 = arith.extui %31 : vector<8x128xi1> to vector<8x128xi32>
      %33 = arith.sitofp %32 : vector<8x128xi32> to vector<8x128xf32>
      %34 = vector.broadcast %28 : vector<1x128xi32> to vector<8x128xi32>
      %35 = arith.cmpi eq, %29, %34 : vector<8x128xi32>
      %36 = arith.extui %35 : vector<8x128xi1> to vector<8x128xi32>
      %37 = arith.sitofp %36 : vector<8x128xi32> to vector<8x128xf32>
      %cst = arith.constant dense<0.000000e+00> : vector<128x128xf32>
      %38 = tpu.matmul %24, %33, %cst {dimension_numbers = #tpu.dot_dimension_numbers<[1], [0], [0], [1], [0, 0, 1, 1], [], []>} : vector<128x8xf32>, vector<8x128xf32>, vector<128x128xf32> -> vector<128x128xf32>
      %cst_13 = arith.constant dense<0.000000e+00> : vector<128x128xf32>
      %39 = tpu.matmul %24, %37, %cst_13 {dimension_numbers = #tpu.dot_dimension_numbers<[1], [0], [0], [1], [0, 0, 1, 1], [], []>} : vector<128x8xf32>, vector<8x128xf32>, vector<128x128xf32> -> vector<128x128xf32>
      %c0_14 = arith.constant 0 : index
      %c0_15 = arith.constant 0 : index
      %c128_16 = arith.constant 128 : index
      %40 = vector.load %arg6[%c0_14, %c0_15, %c128_16] : memref<1x136x896xf32, #tpu.memory_space<vmem>>, vector<1x128x128xf32>
      %41 = vector.shape_cast %40 : vector<1x128x128xf32> to vector<128x128xf32>
      %c0_17 = arith.constant 0 : index
      %c0_18 = arith.constant 0 : index
      %c0_19 = arith.constant 0 : index
      %42 = vector.load %arg5[%c0_17, %c0_18, %c0_19] : memref<1x128x128xf32, #tpu.memory_space<vmem>>, vector<1x128x128xf32>
      %43 = vector.shape_cast %42 : vector<1x128x128xf32> to vector<128x128xf32>
      %cst_20 = arith.constant dense<0.000000e+00> : vector<128x128xf32>
      %44 = tpu.matmul %41, %43, %cst_20 {dimension_numbers = #tpu.dot_dimension_numbers<[1], [0], [0], [1], [0, 0, 1, 1], [], []>} : vector<128x128xf32>, vector<128x128xf32>, vector<128x128xf32> -> vector<128x128xf32>
      %45 = vector.broadcast %3 : vector<128x1xf32> to vector<128x128xf32>
      %46 = arith.addf %44, %45 : vector<128x128xf32>
      %c0_21 = arith.constant 0 : index
      %c0_22 = arith.constant 0 : index
      %c256 = arith.constant 256 : index
      %47 = vector.load %arg6[%c0_21, %c0_22, %c256] : memref<1x136x896xf32, #tpu.memory_space<vmem>>, vector<1x128x384xf32>
      %48 = vector.shape_cast %47 : vector<1x128x384xf32> to vector<128x384xf32>
      %49 = tpu.concatenate %38, %39, %46 in 0 : vector<128x128xf32>, vector<128x128xf32>, vector<128x128xf32> -> vector<384x128xf32>
      %cst_23 = arith.constant dense<0.000000e+00> : vector<128x128xf32>
      %50 = tpu.matmul %48, %49, %cst_23 {dimension_numbers = #tpu.dot_dimension_numbers<[1], [0], [0], [1], [0, 0, 1, 1], [], []>} : vector<128x384xf32>, vector<384x128xf32>, vector<128x128xf32> -> vector<128x128xf32>
      %51 = vector.broadcast %4 : vector<128x1xf32> to vector<128x128xf32>
      %52 = arith.addf %50, %51 : vector<128x128xf32>
      %53 = math.tanh %52 : vector<128x128xf32>
      %54 = vector.broadcast %5 : vector<128x1xf32> to vector<128x128xf32>
      %55 = arith.mulf %53, %54 : vector<128x128xf32>
      %cst_24 = arith.constant dense<0.000000e+00> : vector<128xf32>
      %56 = vector.multi_reduction <add>, %55, %cst_24 [0] : vector<128x128xf32> to vector<128xf32>
      %57 = vector.shape_cast %56 : vector<128xf32> to vector<1x128xf32>
      %58 = vector.broadcast %11 : vector<1x1xf32> to vector<1x128xf32>
      %59 = arith.addf %57, %58 : vector<1x128xf32>
      %60 = math.exp %59 : vector<1x128xf32>
      %61 = tpu.iota {dimensions = array<i32: 0>} : vector<128x128xi32>
      %c32_i32 = arith.constant 32 : i32
      %62 = vector.broadcast %c32_i32 : i32 to vector<128x128xi32>
      %63 = arith.cmpi eq, %61, %62 : vector<128x128xi32>
      %64 = vector.broadcast %60 : vector<1x128xf32> to vector<128x128xf32>
      %65 = arith.mulf %39, %64 : vector<128x128xf32>
      %66 = vector.shape_cast %60 : vector<1x128xf32> to vector<1x128xf32>
      %67 = vector.broadcast %66 : vector<1x128xf32> to vector<128x128xf32>
      %68 = arith.select %63, %67, %65 : vector<128x128xi1>, vector<128x128xf32>
      %c0_25 = arith.constant 0 : index
      %c0_26 = arith.constant 0 : index
      %69 = vector.load %arg9[%c0_25, %c0_26] : memref<8x128xf32, #tpu.memory_space<vmem>>, vector<8x128xf32>
      %cst_27 = arith.constant dense<0.000000e+00> : vector<8x128xf32>
      %70 = tpu.matmul %33, %68, %cst_27 {dimension_numbers = #tpu.dot_dimension_numbers<[1], [1], [0], [0], [0, 0, 1, 0], [], []>} : vector<8x128xf32>, vector<128x128xf32>, vector<8x128xf32> -> vector<8x128xf32>
      %71 = arith.addf %69, %70 : vector<8x128xf32>
      %c0_28 = arith.constant 0 : index
      %c0_29 = arith.constant 0 : index
      %72 = vector.load %arg9[%c0_28, %c0_29] : memref<8x128xf32, #tpu.memory_space<vmem>>, vector<8x128xf32>
      tpu.vector_store %arg9[%c0_28, %c0_29], %71 {strides = array<i32>} : memref<8x128xf32, #tpu.memory_space<vmem>>, vector<8x128xf32>,
    } else {
    }
    %c0_i32_4 = arith.constant 0 : i32
    %21 = arith.cmpi eq, %arg1, %c0_i32_4 : i32
    %22 = arith.extui %21 : i1 to i32
    %c0_i32_5 = arith.constant 0 : i32
    %23 = arith.cmpi ne, %22, %c0_i32_5 : i32
    scf.if %23 {
      %c0_6 = arith.constant 0 : index
      %c0_7 = arith.constant 0 : index
      %24 = vector.load %arg9[%c0_6, %c0_7] : memref<8x128xf32, #tpu.memory_space<vmem>>, vector<8x128xf32>
      %25 = vector.extract_strided_slice %24 {offsets = [0, 32], sizes = [8, 1], strides = [1, 1]} : vector<8x128xf32> to vector<8x1xf32>
      %cst = arith.constant 0.000000e+00 : f32
      %26 = vector.broadcast %cst : f32 to vector<8x1xf32>
      %27 = arith.cmpf ogt, %25, %26 : vector<8x1xf32>
      %cst_8 = arith.constant 1.000000e+00 : f32
      %28 = vector.broadcast %cst_8 : f32 to vector<8x1xf32>
      %29 = arith.select %27, %25, %28 : vector<8x1xi1>, vector<8x1xf32>
      %30 = tpu.reciprocal %29 {approx = true} : vector<8x1xf32> -> vector<8x1xf32>
      %31 = vector.broadcast %30 : vector<8x1xf32> to vector<8x128xf32>
      %32 = arith.mulf %24, %31 : vector<8x128xf32>
      %c0_9 = arith.constant 0 : index
      %c0_10 = arith.constant 0 : index
      %c640_11 = arith.constant 640 : index
      %33 = vector.load %arg6[%c0_9, %c0_10, %c640_11] : memref<1x136x896xf32, #tpu.memory_space<vmem>>, vector<1x128x128xf32>
      %34 = vector.shape_cast %33 : vector<1x128x128xf32> to vector<128x128xf32>
      %cst_12 = arith.constant dense<0.000000e+00> : vector<8x128xf32>
      %35 = tpu.matmul %32, %34, %cst_12 {dimension_numbers = #tpu.dot_dimension_numbers<[1], [0], [0], [1], [0, 0, 1, 1], [], []>} : vector<8x128xf32>, vector<128x128xf32>, vector<8x128xf32> -> vector<8x128xf32>
      %36 = vector.broadcast %8 : vector<1x128xf32> to vector<8x128xf32>
      %37 = arith.addf %35, %36 : vector<8x128xf32>
      %cst_13 = arith.constant dense<0.000000e+00> : vector<8xf32>
      %38 = vector.multi_reduction <add>, %37, %cst_13 [1] : vector<8x128xf32> to vector<8xf32>
      %39 = vector.shape_cast %38 : vector<8xf32> to vector<8x1xf32>
      %cst_14 = arith.constant 3.125000e-02 : f32
      %40 = vector.broadcast %cst_14 : f32 to vector<8x1xf32>
      %41 = arith.mulf %39, %40 : vector<8x1xf32>
      %42 = arith.mulf %37, %37 : vector<8x128xf32>
      %cst_15 = arith.constant dense<0.000000e+00> : vector<8xf32>
      %43 = vector.multi_reduction <add>, %42, %cst_15 [1] : vector<8x128xf32> to vector<8xf32>
      %44 = vector.shape_cast %43 : vector<8xf32> to vector<8x1xf32>
      %cst_16 = arith.constant 3.125000e-02 : f32
      %45 = vector.broadcast %cst_16 : f32 to vector<8x1xf32>
      %46 = arith.mulf %44, %45 : vector<8x1xf32>
      %47 = arith.mulf %41, %41 : vector<8x1xf32>
      %48 = arith.subf %46, %47 : vector<8x1xf32>
      %49 = vector.broadcast %41 : vector<8x1xf32> to vector<8x128xf32>
      %50 = arith.subf %37, %49 : vector<8x128xf32>
      %cst_17 = arith.constant 9.99999974E-6 : f32
      %51 = vector.broadcast %cst_17 : f32 to vector<8x1xf32>
      %52 = arith.addf %48, %51 : vector<8x1xf32>
      %53 = math.rsqrt %52 : vector<8x1xf32>
      %54 = vector.broadcast %53 : vector<8x1xf32> to vector<8x128xf32>
      %55 = arith.mulf %50, %54 : vector<8x128xf32>
      %56 = vector.broadcast %9 : vector<1x128xf32> to vector<8x128xf32>
      %57 = arith.mulf %55, %56 : vector<8x128xf32>
      %58 = vector.broadcast %10 : vector<1x128xf32> to vector<8x128xf32>
      %59 = arith.addf %57, %58 : vector<8x128xf32>
      %cst_18 = arith.constant 0.000000e+00 : f32
      %60 = vector.broadcast %cst_18 : f32 to vector<8x128xf32>
      %61 = arith.maximumf %59, %60 : vector<8x128xf32>
      %62 = vector.extract_strided_slice %61 {offsets = [0, 0], sizes = [8, 32], strides = [1, 1]} : vector<8x128xf32> to vector<8x32xf32>
      %c0_19 = arith.constant 0 : index
      %c0_20 = arith.constant 0 : index
      %c0_21 = arith.constant 0 : index
      %63 = vector.load %arg7[%c0_19, %c0_20, %c0_21] : memref<1x8x32xf32, #tpu.memory_space<vmem>>, vector<1x8x32xf32>
      %64 = vector.shape_cast %63 : vector<1x8x32xf32> to vector<8x32xf32>
      %65 = vector.shape_cast %62 : vector<8x32xf32> to vector<1x8x32xf32>
      tpu.vector_store %arg7[%c0_19, %c0_20, %c0_21], %65 {strides = array<i32>} : memref<1x8x32xf32, #tpu.memory_space<vmem>>, vector<1x8x32xf32>,
    } else {
    }
    return
  }
  func.func @transform_0(%arg0: i32, %arg1: i32, %arg2: memref<2xi32, #tpu.memory_space<smem>>) -> (i32, i32) {
    %c0_i32 = arith.constant 0 : i32
    %c0_i32_0 = arith.constant 0 : i32
    %c0_i32_1 = arith.constant 0 : i32
    return %c0_i32, %c0_i32_0 : i32, i32
  }
  func.func @transform_1(%arg0: i32, %arg1: i32, %arg2: memref<2xi32, #tpu.memory_space<smem>>) -> (i32, i32, i32) {
    %c0_i32 = arith.constant 0 : i32
    %c0_i32_0 = arith.constant 0 : i32
    return %arg0, %c0_i32, %arg1 : i32, i32, i32
  }
  func.func @transform_2(%arg0: i32, %arg1: i32, %arg2: memref<2xi32, #tpu.memory_space<smem>>) -> (i32, i32, i32) {
    %c0_i32 = arith.constant 0 : i32
    %c0_i32_0 = arith.constant 0 : i32
    return %arg0, %c0_i32, %arg1 : i32, i32, i32
  }
  func.func @transform_3(%arg0: i32, %arg1: i32, %arg2: memref<2xi32, #tpu.memory_space<smem>>) -> (i32, i32, i32) {
    %c0_i32 = arith.constant 0 : i32
    %c0_i32_0 = arith.constant 0 : i32
    %c0_i32_1 = arith.constant 0 : i32
    return %arg0, %c0_i32, %c0_i32_0 : i32, i32, i32
  }
  func.func @transform_4(%arg0: i32, %arg1: i32, %arg2: memref<2xi32, #tpu.memory_space<smem>>) -> (i32, i32, i32) {
    %c0_i32 = arith.constant 0 : i32
    %c0_i32_0 = arith.constant 0 : i32
    %c0_i32_1 = arith.constant 0 : i32
    return %arg0, %c0_i32, %c0_i32_0 : i32, i32, i32
  }
}

</mosaic_0001>

<llo_original>
// kernel: tpu_custom_call.1
$region0: #{tpu_custom_call.1}
  #allocation0 [shape = 'u32[]', space=smem, size = 0x4, offset = 0x4, fixed_abs, tag = 'smem constant byte address 0x4 - core index']
  #allocation1 [shape = 'u32[144,128]{1,0:T(1,128)}', space=vmem, size = 0x12000, scoped, tag = 'internal scratch']
  #allocation2 [shape = 'f32[128,8]{1,0:T(8,128)}', space=vmem, size = 0x10000, scoped, tag = 'scratch operand']
  #allocation3 [shape = 'f32[8,128]{1,0:T(8,128)}', space=vmem, size = 0x1000, scoped, tag = 'scratch operand']
  #allocation4 [shape = 's32[1]{0}', space=sflag, size = 0x4, scoped, tag = 'scoped memory for tpu_custom_call.1']
  #allocation5 [shape = 'u8[512]{0}', space=smem, size = 0x200, scoped, tag = 'prefetched SMEM operand 0']
  %s0 = inlined_call_operand.vmem [shape: s32[2], index: 0, kind: input, shape index: {}]
  %s1 = inlined_call_operand.vmem [shape: f32[128,8], index: 1, kind: input, shape index: {}]
  %s2 = inlined_call_operand.vmem [shape: s32[2,2,128], index: 2, kind: input, shape index: {}]
  %s3 = inlined_call_operand.hbm [shape: f32[2,128,128], index: 3, kind: input, shape index: {}]
  %s4 = inlined_call_operand.hbm [shape: f32[2,136,896], index: 4, kind: input, shape index: {}]
  %s5 = inlined_call_operand.hbm [shape: f32[2,8,32], index: 5, kind: output, shape index: {}]
  %s6 = sld [smem:[#allocation0]]
  $region69: #{tpu_custom_call.1} parent=0
    _
  %s8 = ssub.s32 1, %s6
  %s9 = scalar_select 0, %s8, %s6
  %s10 = sshll.u32 %s0, 4
  %s11 = int_to_ptr.vmem [resolvable:$true] %s10
  %13 = dma.vmem_to_smem %s11, 16, [#allocation5], [#allocation4]
  %14 = dma.done [#allocation4], 16
  %15 = sfence
  $region1: #{tpu_custom_call.1} parent=0
    #allocation6 [shape = 'u8[131072]{0}', space=vmem, size = 0x20000, scoped, tag = 'input window, operand 3']
    #allocation7 [shape = 's32[2]{0}', space=sflag, size = 0x8, scoped, tag = 'scoped memory for tpu_custom_call.1']
    #allocation8 [shape = 's32[2]{0}', space=sflag, size = 0x8, scoped, tag = 'scoped memory for tpu_custom_call.1']
    #allocation9 [shape = 'u8[974848]{0}', space=vmem, size = 0xee000, scoped, tag = 'input window, operand 4']
    #allocation10 [shape = 's32[2]{0}', space=sflag, size = 0x8, scoped, tag = 'scoped memory for tpu_custom_call.1']
    #allocation11 [shape = 'u8[8192]{0}', space=vmem, size = 0x2000, scoped, tag = 'output window, operand 0']
    %16 = vsyncpa [#allocation7], 0
    %s17 = scalar_lea.sflag [#allocation7], 1
    %18 = vsyncpa %s17, 0
    %19 = vsyncpa [#allocation10], 0
    %s20 = scalar_lea.sflag [#allocation10], 1
    %21 = vsyncpa %s20, 0
    %22 = vsyncpa [#allocation8], 0
    %s23 = scalar_lea.sflag [#allocation8], 1
    %24 = vsyncpa %s23, 0
    loop: start=0, step=1, limit=4
    $region2: #{tpu_custom_call.1} parent=1 // loop_pre_header
      _
    $region3: #{tpu_custom_call.1} parent=1 // loop_header
      %s26 = sphi 0, %s30
      %p27 = scmp.ge.s32.totalorder %s26, 4
      %s33 = sphi 0, %s45
      %s34 = sphi 0, %s41
      %s35 = sphi 0, %s33
      %s36 = sphi 0, %s34
      %s37 = sphi 0, %s35
      %s38 = sphi 0, %s36
      %s46 = sphi 0, %s46
      %s48 = sphi 0, %s46
      %s49 = sphi 0, %s48
      %s63 = sphi 0, %s49
      %s71 = sphi 0, %s73
      %s74 = sphi 0, %s71
      %s75 = sphi 0, %s74
      %s91 = sphi 0, %s75
      %s99 = sphi 0, %s101
      %s102 = sphi 0, %s99
      %s103 = sphi 0, %s102
      %s119 = sphi 0, %s103
      %s125 = sphi 0, %s127
      %s128 = sphi 0, %s125
      %s129 = sphi 0, %s128
      %s145 = sphi 0, %s129
      %s151 = sphi 0, %s153
      %s154 = sphi 0, %s151
      %s155 = sphi 0, %s154
      %s171 = sphi 0, %s155
    $region4: #{tpu_custom_call.1} parent=1 // loop_header_branch
      %29 = sbr.rel (%p27) target = $region8
    $region5: #{tpu_custom_call.1} parent=1 // loop_body
      %s31 = ssub.s32 %s26, 1
      %s32 = ssub.s32 %s26, 2
      %s39 = sadd.s32 1, %s34
      %p40 = scmp.ge.s32.totalorder %s39, 1
      %s41 = scalar_select %p40, 0, %s39
      %s42 = sadd.s32 1, %s33
      %s43 = scalar_select %p40, %s42, %s33
      %p44 = scmp.ge.s32.totalorder %s43, 2
      %s45 = scalar_select %p44, 0, %s43
      %s47 = sadd.s32 %s46, 1
      %p50 = scmp.eq.s32.totalorder %s26, 1
      %p51 = scmp.ne.s32.totalorder %s46, %s48
      %p52 = scmp.eq.s32.totalorder %s26, 0
      %p53 = por %p51, %p52
      %p54 = scmp.ne.s32.totalorder %s46, %s48
      %p55 = scmp.eq.s32.totalorder %s31, 1
      %p56 = por %p54, %p55
      %p57 = scmp.ne.s32.totalorder %s48, %s49
      %p58 = scmp.eq.s32.totalorder %s31, 0
      %p59 = por %p57, %p58
      %p60 = scmp.ne.s32.totalorder %s48, %s49
      %p61 = scmp.eq.s32.totalorder %s32, 1
      %p62 = por %p60, %p61
      %p64 = scmp.ne.s32.totalorder %s49, %s63
      %p65 = scmp.eq.s32.totalorder %s32, 0
      %p66 = por %p64, %p65
      %s67 = ssub.s32 %s33, %s45
      %s68 = ssub.s32 %s34, %s41
      %s69 = sor.u32 %s67, %s68
      %p70 = scmp.eq.s32.totalorder %s69, 0
      %s72 = sadd.s32 %s71, 1
      %s73 = scalar_select %p70, %s71, %s72
      %p76 = pneg %p70
      %p77 = scmp.eq.s32.totalorder %s26, 1
      %p78 = por %p76, %p77
      %p79 = scmp.ne.s32.totalorder %s71, %s74
      %p80 = scmp.eq.s32.totalorder %s26, 0
      %p81 = por %p79, %p80
      %p82 = scmp.ne.s32.totalorder %s71, %s74
      %p83 = scmp.eq.s32.totalorder %s31, 1
      %p84 = por %p82, %p83
      %p85 = scmp.ne.s32.totalorder %s74, %s75
      %p86 = scmp.eq.s32.totalorder %s31, 0
      %p87 = por %p85, %p86
      %p88 = scmp.ne.s32.totalorder %s74, %s75
      %p89 = scmp.eq.s32.totalorder %s32, 1
      %p90 = por %p88, %p89
      %p92 = scmp.ne.s32.totalorder %s75, %s91
      %p93 = scmp.eq.s32.totalorder %s32, 0
      %p94 = por %p92, %p93
      %s95 = ssub.s32 %s33, %s45
      %s96 = ssub.s32 %s34, %s41
      %s97 = sor.u32 %s95, %s96
      %p98 = scmp.eq.s32.totalorder %s97, 0
      %s100 = sadd.s32 %s99, 1
      %s101 = scalar_select %p98, %s99, %s100
      %p104 = pneg %p98
      %p105 = scmp.eq.s32.totalorder %s26, 1
      %p106 = por %p104, %p105
      %p107 = scmp.ne.s32.totalorder %s99, %s102
      %p108 = scmp.eq.s32.totalorder %s26, 0
      %p109 = por %p107, %p108
      %p110 = scmp.ne.s32.totalorder %s99, %s102
      %p111 = scmp.eq.s32.totalorder %s31, 1
      %p112 = por %p110, %p111
      %p113 = scmp.ne.s32.totalorder %s102, %s103
      %p114 = scmp.eq.s32.totalorder %s31, 0
      %p115 = por %p113, %p114
      %p116 = scmp.ne.s32.totalorder %s102, %s103
      %p117 = scmp.eq.s32.totalorder %s32, 1
      %p118 = por %p116, %p117
      %p120 = scmp.ne.s32.totalorder %s103, %s119
      %p121 = scmp.eq.s32.totalorder %s32, 0
      %p122 = por %p120, %p121
      %s123 = ssub.s32 %s33, %s45
      %p124 = scmp.eq.s32.totalorder %s123, 0
      %s126 = sadd.s32 %s125, 1
      %s127 = scalar_select %p124, %s125, %s126
      %p130 = pneg %p124
      %p131 = scmp.eq.s32.totalorder %s26, 1
      %p132 = por %p130, %p131
      %p133 = scmp.ne.s32.totalorder %s125, %s128
      %p134 = scmp.eq.s32.totalorder %s26, 0
      %p135 = por %p133, %p134
      %p136 = scmp.ne.s32.totalorder %s125, %s128
      %p137 = scmp.eq.s32.totalorder %s31, 1
      %p138 = por %p136, %p137
      %p139 = scmp.ne.s32.totalorder %s128, %s129
      %p140 = scmp.eq.s32.totalorder %s31, 0
      %p141 = por %p139, %p140
      %p142 = scmp.ne.s32.totalorder %s128, %s129
      %p143 = scmp.eq.s32.totalorder %s32, 1
      %p144 = por %p142, %p143
      %p146 = scmp.ne.s32.totalorder %s129, %s145
      %p147 = scmp.eq.s32.totalorder %s32, 0
      %p148 = por %p146, %p147
      %s149 = ssub.s32 %s33, %s45
      %p150 = scmp.eq.s32.totalorder %s149, 0
      %s152 = sadd.s32 %s151, 1
      %s153 = scalar_select %p150, %s151, %s152
      %p156 = pneg %p150
      %p157 = scmp.eq.s32.totalorder %s26, 1
      %p158 = por %p156, %p157
      %p159 = scmp.ne.s32.totalorder %s151, %s154
      %p160 = scmp.eq.s32.totalorder %s26, 0
      %p161 = por %p159, %p160
      %p162 = scmp.ne.s32.totalorder %s151, %s154
      %p163 = scmp.eq.s32.totalorder %s31, 1
      %p164 = por %p162, %p163
      %p165 = scmp.ne.s32.totalorder %s154, %s155
      %p166 = scmp.eq.s32.totalorder %s31, 0
      %p167 = por %p165, %p166
      %p168 = scmp.ne.s32.totalorder %s154, %s155
      %p169 = scmp.eq.s32.totalorder %s32, 1
      %p170 = por %p168, %p169
      %p172 = scmp.ne.s32.totalorder %s155, %s171
      %p173 = scmp.eq.s32.totalorder %s32, 0
      %p174 = por %p172, %p173
      %p175 = scmp.le.s32.totalorder 1, %s26
      %p176 = scmp.lt.s32.totalorder %s26, 3
      %p177 = pnand %p175, %p176
      %p178 = pneg %p177
      // Predicated region
      $region9: #{tpu_custom_call.1} parent=5 // pred_check
        _
      $region10: #{tpu_custom_call.1} parent=5 // pred_check_branch
        %180 = sbr.rel (%p177) target = $region12
      $region11: #{tpu_custom_call.1} parent=5 // pred_region
        %s181 = ssub.s32 %s26, 1
        // Predicated region
        $region13: #{tpu_custom_call.1} parent=11 // pred_check
          %p182 = pneg %p59
        $region14: #{tpu_custom_call.1} parent=11 // pred_check_branch
          %184 = sbr.rel (%p182) target = $region16
        $region15: #{tpu_custom_call.1} parent=11 // pred_region
          _
        $region16: #{tpu_custom_call.1} parent=11 // pred_fallthru
          _
      $region12: #{tpu_custom_call.1} parent=5 // pred_fallthru
        _
      %p185 = scmp.lt.s32.totalorder %s26, 2
      // Predicated region
      $region17: #{tpu_custom_call.1} parent=5 // pred_check
        %p186 = pneg %p185
      $region18: #{tpu_custom_call.1} parent=5 // pred_check_branch
        %188 = sbr.rel (%p186) target = $region20
      $region19: #{tpu_custom_call.1} parent=5 // pred_region
        // Predicated region
        $region21: #{tpu_custom_call.1} parent=19 // pred_check
          %p189 = pneg %p81
        $region22: #{tpu_custom_call.1} parent=19 // pred_check_branch
          %191 = sbr.rel (%p189) target = $region24
        $region23: #{tpu_custom_call.1} parent=19 // pred_region
          %p192 = scmp.lt.s32.totalorder %s33, 1
          %s193 = scalar_select %p192, %s33, 1
          %p194 = scmp.lt.s32.totalorder %s34, 0
          %s195 = scalar_select %p194, %s34, 0
          %s196 = sadd.s32 %s195, %s193
          %s197 = smul.addr %s196, 2
          %s198 = scalar_lea.vmem %s2, %s197
        $region24: #{tpu_custom_call.1} parent=19 // pred_fallthru
          _
        // Predicated region
        $region25: #{tpu_custom_call.1} parent=19 // pred_check
          %p199 = pneg %p109
        $region26: #{tpu_custom_call.1} parent=19 // pred_check_branch
          %201 = sbr.rel (%p199) target = $region28
        $region27: #{tpu_custom_call.1} parent=19 // pred_region
          %s202 = sand.u32 %s99, 1
          %s203 = scalar_lea.sflag [#allocation7], %s202
          %s204 = sand.u32 %s99, 1
          %s205 = smul.addr %s204, 128
          %s206 = scalar_lea.vmem [#allocation6], %s205
          %s208 = ssub.s32 2048, 2048
          %209 = vsyncadd %s203, %s208
          %s210 = smul.addr %s33, 16
          %s211 = sadd.s32 %s34, %s210
          %s212 = smul.addr %s211, 128
          %s213 = scalar_lea.hbm %s3, %s212
          %s214 = sshll.u32 %s206, 4
          %s215 = int_to_ptr.vmem [resolvable:$true] %s214
          %220 = dma.hbm_to_vmem [thread:$0]  %s213, 2048, %s215, %s203, 128, 128, 8
        $region28: #{tpu_custom_call.1} parent=19 // pred_fallthru
          _
        // Predicated region
        $region29: #{tpu_custom_call.1} parent=19 // pred_check
          %p221 = pneg %p135
        $region30: #{tpu_custom_call.1} parent=19 // pred_check_branch
          %223 = sbr.rel (%p221) target = $region32
        $region31: #{tpu_custom_call.1} parent=19 // pred_region
          %s224 = sand.u32 %s125, 1
          %s225 = scalar_lea.sflag [#allocation10], %s224
          %s226 = sand.u32 %s125, 1
          %s227 = smul.addr %s226, 952
          %s228 = scalar_lea.vmem [#allocation9], %s227
          %s230 = ssub.s32 15232, 15232
          %231 = vsyncadd %s225, %s230
          %s232 = smul.addr %s33, 119
          %s233 = smul.addr %s232, 128
          %s234 = scalar_lea.hbm %s4, %s233
          %s235 = sshll.u32 %s228, 4
          %s236 = int_to_ptr.vmem [resolvable:$true] %s235
          %241 = dma.hbm_to_vmem [thread:$0]  %s234, 15232, %s236, %s225, 896, 896, 56
        $region32: #{tpu_custom_call.1} parent=19 // pred_fallthru
          _
      $region20: #{tpu_custom_call.1} parent=5 // pred_fallthru
        _
      %p242 = scmp.le.s32.totalorder 1, %s26
      %p243 = scmp.lt.s32.totalorder %s26, 3
      %p244 = pnand %p242, %p243
      %p245 = pneg %p244
      // Predicated region
      $region33: #{tpu_custom_call.1} parent=5 // pred_check
        _
      $region34: #{tpu_custom_call.1} parent=5 // pred_check_branch
        %247 = sbr.rel (%p244) target = $region36
      $region35: #{tpu_custom_call.1} parent=5 // pred_region
        %s248 = ssub.s32 %s26, 1
        %s249 = sand.u32 %s102, 1
        %s250 = scalar_lea.sflag [#allocation7], %s249
        %s251 = sand.u32 %s102, 1
        %s252 = smul.addr %s251, 128
        %s253 = scalar_lea.vmem [#allocation6], %s252
        // Predicated region
        $region37: #{tpu_custom_call.1} parent=35 // pred_check
          %p254 = pneg %p115
        $region38: #{tpu_custom_call.1} parent=35 // pred_check_branch
          %256 = sbr.rel (%p254) target = $region40
        $region39: #{tpu_custom_call.1} parent=35 // pred_region
          %257 = dma.done %s250, 2048
        $region40: #{tpu_custom_call.1} parent=35 // pred_fallthru
          _
        %s258 = sand.u32 %s128, 1
        %s259 = scalar_lea.sflag [#allocation10], %s258
        %s260 = sand.u32 %s128, 1
        %s261 = smul.addr %s260, 952
        %s262 = scalar_lea.vmem [#allocation9], %s261
        // Predicated region
        $region41: #{tpu_custom_call.1} parent=35 // pred_check
          %p263 = pneg %p141
        $region42: #{tpu_custom_call.1} parent=35 // pred_check_branch
          %265 = sbr.rel (%p263) target = $region44
        $region43: #{tpu_custom_call.1} parent=35 // pred_region
          %266 = dma.done %s259, 15232
        $region44: #{tpu_custom_call.1} parent=35 // pred_fallthru
          _
        %p267 = pneg %p59
        %p268 = pneg %p56
        %p269 = scmp.lt.s32.totalorder %s35, 1
        %s270 = scalar_select %p269, %s35, 1
        %p271 = scmp.lt.s32.totalorder %s36, 0
        %s272 = scalar_select %p271, %s36, 0
        %s273 = sadd.s32 %s272, %s270
        %s274 = smul.addr %s273, 2
        %s275 = scalar_lea.vmem %s2, %s274
        %p276 = pneg %p87
        %p277 = pneg %p84
        %s278 = sand.u32 %s102, 1
        %s279 = scalar_lea.sflag [#allocation7], %s278
        %s280 = sand.u32 %s102, 1
        %s281 = smul.addr %s280, 128
        %s282 = scalar_lea.vmem [#allocation6], %s281
        %p283 = pneg %p115
        %p284 = pneg %p112
        %s285 = sand.u32 %s128, 1
        %s286 = scalar_lea.sflag [#allocation10], %s285
        %s287 = sand.u32 %s128, 1
        %s288 = smul.addr %s287, 952
        %s289 = scalar_lea.vmem [#allocation9], %s288
        %p290 = pneg %p141
        %p291 = pneg %p138
        %p292 = pneg %p167
        %p293 = pneg %p164
        %s294 = sand.u32 %s154, 1
        %s295 = scalar_lea.sflag [#allocation8], %s294
        %s296 = sand.u32 %s154, 1
        %s297 = smul.addr %s296, 8
        %s298 = scalar_lea.vmem [#allocation11], %s297
        %p299 = scmp.lt.s32.totalorder %s35, 1
        %s300 = scalar_select %p299, %s35, 1
        %p301 = scmp.lt.s32.totalorder %s36, 0
        %s302 = scalar_select %p301, %s36, 0
        %s303 = sadd.s32 %s302, %s300
        %s304 = smul.addr %s303, 2
        %s305 = scalar_lea.vmem %s2, %s304
        %v306 = vld [vmem:[%s262 + $0x30] sm:$0xff]
        %v307 = vld [vmem:[%s262 + $0x68] sm:$0xff]
        %v308 = vld [vmem:[%s262 + $0xa0] sm:$0xff]
        %v309 = vld [vmem:[%s262 + $0xd8] sm:$0xff]
        %v310 = vld [vmem:[%s262 + $0x110] sm:$0xff]
        %v311 = vld [vmem:[%s262 + $0x148] sm:$0xff]
        %v312 = vld [vmem:[%s262 + $0x180] sm:$0xff]
        %v313 = vld [vmem:[%s262 + $0x1b8] sm:$0xff]
        %v314 = vld [vmem:[%s262 + $0x1f0] sm:$0xff]
        %v315 = vld [vmem:[%s262 + $0x228] sm:$0xff]
        %v316 = vld [vmem:[%s262 + $0x260] sm:$0xff]
        %v317 = vld [vmem:[%s262 + $0x298] sm:$0xff]
        %v318 = vld [vmem:[%s262 + $0x2d0] sm:$0xff]
        %v319 = vld [vmem:[%s262 + $0x308] sm:$0xff]
        %v320 = vld [vmem:[%s262 + $0x340] sm:$0xff]
        %v321 = vld [vmem:[%s262 + $0x378] sm:$0xff]
        %v322 = vld [vmem:[%s262 + $0x3a8] sm:$0xff]
        %p323 = scmp.eq.s32.totalorder %s36, 0
        // Predicated region
        $region45: #{tpu_custom_call.1} parent=35 // pred_check
          %p324 = pneg %p323
        $region46: #{tpu_custom_call.1} parent=35 // pred_check_branch
          %326 = sbr.rel (%p324) target = $region48
        $region47: #{tpu_custom_call.1} parent=35 // pred_region
          %v327 = vld [vmem:[%s262] sm:$0xff]
          %v328 = vld [vmem:[%s262 + $0x38] sm:$0xff]
          %v329 = vld [vmem:[%s262 + $0x70] sm:$0xff]
          %v330 = vld [vmem:[%s262 + $0xa8] sm:$0xff]
          %v331 = vld [vmem:[%s262 + $0xe0] sm:$0xff]
          %v332 = vld [vmem:[%s262 + $0x118] sm:$0xff]
          %v333 = vld [vmem:[%s262 + $0x150] sm:$0xff]
          %v334 = vld [vmem:[%s262 + $0x188] sm:$0xff]
          %v335 = vld [vmem:[%s262 + $0x1c0] sm:$0xff]
          %v336 = vld [vmem:[%s262 + $0x1f8] sm:$0xff]
          %v337 = vld [vmem:[%s262 + $0x230] sm:$0xff]
          %v338 = vld [vmem:[%s262 + $0x268] sm:$0xff]
          %v339 = vld [vmem:[%s262 + $0x2a0] sm:$0xff]
          %v340 = vld [vmem:[%s262 + $0x2d8] sm:$0xff]
          %v341 = vld [vmem:[%s262 + $0x310] sm:$0xff]
          %v342 = vld [vmem:[%s262 + $0x348] sm:$0xff]
          %v343 = vld [vmem:[%s1] sm:$0xff]
          %v344 = vld [vmem:[%s1 + $0x8] sm:$0xff]
          %v345 = vld [vmem:[%s1 + $0x10] sm:$0xff]
          %v346 = vld [vmem:[%s1 + $0x18] sm:$0xff]
          %v347 = vld [vmem:[%s1 + $0x20] sm:$0xff]
          %v348 = vld [vmem:[%s1 + $0x28] sm:$0xff]
          %v349 = vld [vmem:[%s1 + $0x30] sm:$0xff]
          %v350 = vld [vmem:[%s1 + $0x38] sm:$0xff]
          %v351 = vld [vmem:[%s1 + $0x40] sm:$0xff]
          %v352 = vld [vmem:[%s1 + $0x48] sm:$0xff]
          %v353 = vld [vmem:[%s1 + $0x50] sm:$0xff]
          %v354 = vld [vmem:[%s1 + $0x58] sm:$0xff]
          %v355 = vld [vmem:[%s1 + $0x60] sm:$0xff]
          %v356 = vld [vmem:[%s1 + $0x68] sm:$0xff]
          %v357 = vld [vmem:[%s1 + $0x70] sm:$0xff]
          %v358 = vld [vmem:[%s1 + $0x78] sm:$0xff]
          %360 = vset.pattern.permute.xlu0 0
          %361 = vperm.xlu0 %360, %v306
          %v362 = vpop.permute.xlu0 %361
          %365 = vset.pattern.permute.xlu0 0
          %366 = vperm.xlu0 %365, %v307
          %v367 = vpop.permute.xlu0 %366
          %370 = vset.pattern.permute.xlu0 0
          %371 = vperm.xlu0 %370, %v308
          %v372 = vpop.permute.xlu0 %371
          %375 = vset.pattern.permute.xlu0 0
          %376 = vperm.xlu0 %375, %v309
          %v377 = vpop.permute.xlu0 %376
          %380 = vset.pattern.permute.xlu0 0
          %381 = vperm.xlu0 %380, %v310
          %v382 = vpop.permute.xlu0 %381
          %385 = vset.pattern.permute.xlu0 0
          %386 = vperm.xlu0 %385, %v311
          %v387 = vpop.permute.xlu0 %386
          %390 = vset.pattern.permute.xlu0 0
          %391 = vperm.xlu0 %390, %v312
          %v392 = vpop.permute.xlu0 %391
          %395 = vset.pattern.permute.xlu0 0
          %396 = vperm.xlu0 %395, %v313
          %v397 = vpop.permute.xlu0 %396
          %400 = vset.pattern.permute.xlu0 0
          %401 = vperm.xlu0 %400, %v314
          %v402 = vpop.permute.xlu0 %401
          %405 = vset.pattern.permute.xlu0 0
          %406 = vperm.xlu0 %405, %v315
          %v407 = vpop.permute.xlu0 %406
          %410 = vset.pattern.permute.xlu0 0
          %411 = vperm.xlu0 %410, %v316
          %v412 = vpop.permute.xlu0 %411
          %415 = vset.pattern.permute.xlu0 0
          %416 = vperm.xlu0 %415, %v317
          %v417 = vpop.permute.xlu0 %416
          %420 = vset.pattern.permute.xlu0 0
          %421 = vperm.xlu0 %420, %v318
          %v422 = vpop.permute.xlu0 %421
          %425 = vset.pattern.permute.xlu0 0
          %426 = vperm.xlu0 %425, %v319
          %v427 = vpop.permute.xlu0 %426
          %430 = vset.pattern.permute.xlu0 0
          %431 = vperm.xlu0 %430, %v320
          %v432 = vpop.permute.xlu0 %431
          %435 = vset.pattern.permute.xlu0 0
          %436 = vperm.xlu0 %435, %v321
          %v437 = vpop.permute.xlu0 %436
          %439 = vmatprep.subr.mxu0 0.0
          %440 = vmatpush1.msra.mxu0 %v358
          %441 = vmatprep.subr.mxu0 0.0
          %442 = vmatpush1.msra.mxu0 %v357
          %443 = vmatprep.subr.mxu0 0.0
          %444 = vmatpush1.msra.mxu0 %v356
          %445 = vmatprep.subr.mxu0 0.0
          %446 = vmatpush1.msra.mxu0 %v355
          %447 = vmatprep.subr.mxu0 0.0
          %448 = vmatpush1.msra.mxu0 %v354
          %449 = vmatprep.subr.mxu0 0.0
          %450 = vmatpush1.msra.mxu0 %v353
          %451 = vmatprep.subr.mxu0 0.0
          %452 = vmatpush1.msra.mxu0 %v352
          %453 = vmatprep.subr.mxu0 0.0
          %454 = vmatpush1.msra.mxu0 %v351
          %455 = vmatprep.subr.mxu0 0.0
          %456 = vmatpush1.msra.mxu0 %v350
          %457 = vmatprep.subr.mxu0 0.0
          %458 = vmatpush1.msra.mxu0 %v349
          %459 = vmatprep.subr.mxu0 0.0
          %460 = vmatpush1.msra.mxu0 %v348
          %461 = vmatprep.subr.mxu0 0.0
          %462 = vmatpush1.msra.mxu0 %v347
          %463 = vmatprep.subr.mxu0 0.0
          %464 = vmatpush1.msra.mxu0 %v346
          %465 = vmatprep.subr.mxu0 0.0
          %466 = vmatpush1.msra.mxu0 %v345
          %467 = vmatprep.subr.mxu0 0.0
          %468 = vmatpush1.msra.mxu0 %v344
          %469 = vmatprep.subr.mxu0 0.0
          %470 = vmatpush1.msra.mxu0 %v343
          %471 = vmatprep.subr.mxu0 0.0
          %472 = vmatpush2.msra.mxu0 0.0
          %473 = vmatprep.subr.mxu0 0.0
          %474 = vmatpush2.msra.mxu0 0.0
          %475 = vmatprep.subr.mxu0 0.0
          %476 = vmatpush2.msra.mxu0 0.0
          %477 = vmatprep.subr.mxu0 0.0
          %478 = vmatpush2.msra.mxu0 0.0
          %479 = vmatprep.subr.mxu0 0.0
          %480 = vmatpush2.msra.mxu0 0.0
          %481 = vmatprep.subr.mxu0 0.0
          %482 = vmatpush2.msra.mxu0 0.0
          %483 = vmatprep.subr.mxu0 0.0
          %484 = vmatpush2.msra.mxu0 0.0
          %485 = vmatprep.subr.mxu0 0.0
          %486 = vmatpush2.msra.mxu0 0.0
          %487 = vmatprep.subr.mxu0 0.0
          %488 = vmatpush2.msra.mxu0 0.0
          %489 = vmatprep.subr.mxu0 0.0
          %490 = vmatpush2.msra.mxu0 0.0
          %491 = vmatprep.subr.mxu0 0.0
          %492 = vmatpush2.msra.mxu0 0.0
          %493 = vmatprep.subr.mxu0 0.0
          %494 = vmatpush2.msra.mxu0 0.0
          %495 = vmatprep.subr.mxu0 0.0
          %496 = vmatpush2.msra.mxu0 0.0
          %497 = vmatprep.subr.mxu0 0.0
          %498 = vmatpush2.msra.mxu0 0.0
          %499 = vmatprep.subr.mxu0 0.0
          %500 = vmatpush2.msra.mxu0 0.0
          %501 = vmatprep.subr.mxu0 0.0
          %502 = vmatpush2.msra.mxu0 0.0
          %503 = vmatprep.mubr.f32.mxu0 0.0
          %504 = vmatmul.mubr.f32.gmra.mxu0 %v327
          %v505 = vpop.f32.mrf.mxu0
          %v506 = vadd.f32 %v362, %v505
          %v507 = vpop.f32.mrf.mxu0
          %508 = vmatprep.mubr.f32.mxu0 0.0
          %509 = vmatmul.mubr.f32.gmra.mxu0 %v328
          %v510 = vpop.f32.mrf.mxu0
          %v511 = vadd.f32 %v367, %v510
          %v512 = vpop.f32.mrf.mxu0
          %513 = vmatprep.mubr.f32.mxu0 0.0
          %514 = vmatmul.mubr.f32.gmra.mxu0 %v329
          %v515 = vpop.f32.mrf.mxu0
          %v516 = vadd.f32 %v372, %v515
          %v517 = vpop.f32.mrf.mxu0
          %518 = vmatprep.mubr.f32.mxu0 0.0
          %519 = vmatmul.mubr.f32.gmra.mxu0 %v330
          %v520 = vpop.f32.mrf.mxu0
          %v521 = vadd.f32 %v377, %v520
          %v522 = vpop.f32.mrf.mxu0
          %523 = vmatprep.mubr.f32.mxu0 0.0
          %524 = vmatmul.mubr.f32.gmra.mxu0 %v331
          %v525 = vpop.f32.mrf.mxu0
          %v526 = vadd.f32 %v382, %v525
          %v527 = vpop.f32.mrf.mxu0
          %528 = vmatprep.mubr.f32.mxu0 0.0
          %529 = vmatmul.mubr.f32.gmra.mxu0 %v332
          %v530 = vpop.f32.mrf.mxu0
          %v531 = vadd.f32 %v387, %v530
          %v532 = vpop.f32.mrf.mxu0
          %533 = vmatprep.mubr.f32.mxu0 0.0
          %534 = vmatmul.mubr.f32.gmra.mxu0 %v333
          %v535 = vpop.f32.mrf.mxu0
          %v536 = vadd.f32 %v392, %v535
          %v537 = vpop.f32.mrf.mxu0
          %538 = vmatprep.mubr.f32.mxu0 0.0
          %539 = vmatmul.mubr.f32.gmra.mxu0 %v334
          %v540 = vpop.f32.mrf.mxu0
          %v541 = vadd.f32 %v397, %v540
          %v542 = vpop.f32.mrf.mxu0
          %543 = vmatprep.mubr.f32.mxu0 0.0
          %544 = vmatmul.mubr.f32.gmra.mxu0 %v335
          %v545 = vpop.f32.mrf.mxu0
          %v546 = vadd.f32 %v402, %v545
          %v547 = vpop.f32.mrf.mxu0
          %548 = vmatprep.mubr.f32.mxu0 0.0
          %549 = vmatmul.mubr.f32.gmra.mxu0 %v336
          %v550 = vpop.f32.mrf.mxu0
          %v551 = vadd.f32 %v407, %v550
          %v552 = vpop.f32.mrf.mxu0
          %553 = vmatprep.mubr.f32.mxu0 0.0
          %554 = vmatmul.mubr.f32.gmra.mxu0 %v337
          %v555 = vpop.f32.mrf.mxu0
          %v556 = vadd.f32 %v412, %v555
          %v557 = vpop.f32.mrf.mxu0
          %558 = vmatprep.mubr.f32.mxu0 0.0
          %559 = vmatmul.mubr.f32.gmra.mxu0 %v338
          %v560 = vpop.f32.mrf.mxu0
          %v561 = vadd.f32 %v417, %v560
          %v562 = vpop.f32.mrf.mxu0
          %563 = vmatprep.mubr.f32.mxu0 0.0
          %564 = vmatmul.mubr.f32.gmra.mxu0 %v339
          %v565 = vpop.f32.mrf.mxu0
          %v566 = vadd.f32 %v422, %v565
          %v567 = vpop.f32.mrf.mxu0
          %568 = vmatprep.mubr.f32.mxu0 0.0
          %569 = vmatmul.mubr.f32.gmra.mxu0 %v340
          %v570 = vpop.f32.mrf.mxu0
          %v571 = vadd.f32 %v427, %v570
          %v572 = vpop.f32.mrf.mxu0
          %573 = vmatprep.mubr.f32.mxu0 0.0
          %574 = vmatmul.mubr.f32.gmra.mxu0 %v341
          %v575 = vpop.f32.mrf.mxu0
          %v576 = vadd.f32 %v432, %v575
          %v577 = vpop.f32.mrf.mxu0
          %578 = vmatprep.mubr.f32.mxu0 0.0
          %579 = vmatmul.mubr.f32.gmra.mxu0 %v342
          %v580 = vpop.f32.mrf.mxu0
          %v581 = vadd.f32 %v437, %v580
          %v582 = vpop.f32.mrf.mxu0
          %583 = vdwg.mxu0
          %vm584 = vcmask 64512
          %585 = vst.msk [vmem:[#allocation2] sm:$0xff] %vm584, %v506
          %586 = vst.msk [vmem:[#allocation2 + $0x8] sm:$0xff] %vm584, %v511
          %587 = vst.msk [vmem:[#allocation2 + $0x10] sm:$0xff] %vm584, %v516
          %588 = vst.msk [vmem:[#allocation2 + $0x18] sm:$0xff] %vm584, %v521
          %589 = vst.msk [vmem:[#allocation2 + $0x20] sm:$0xff] %vm584, %v526
          %590 = vst.msk [vmem:[#allocation2 + $0x28] sm:$0xff] %vm584, %v531
          %591 = vst.msk [vmem:[#allocation2 + $0x30] sm:$0xff] %vm584, %v536
          %592 = vst.msk [vmem:[#allocation2 + $0x38] sm:$0xff] %vm584, %v541
          %593 = vst.msk [vmem:[#allocation2 + $0x40] sm:$0xff] %vm584, %v546
          %594 = vst.msk [vmem:[#allocation2 + $0x48] sm:$0xff] %vm584, %v551
          %595 = vst.msk [vmem:[#allocation2 + $0x50] sm:$0xff] %vm584, %v556
          %596 = vst.msk [vmem:[#allocation2 + $0x58] sm:$0xff] %vm584, %v561
          %597 = vst.msk [vmem:[#allocation2 + $0x60] sm:$0xff] %vm584, %v566
          %598 = vst.msk [vmem:[#allocation2 + $0x68] sm:$0xff] %vm584, %v571
          %599 = vst.msk [vmem:[#allocation2 + $0x70] sm:$0xff] %vm584, %v576
          %600 = vst.msk [vmem:[#allocation2 + $0x78] sm:$0xff] %vm584, %v581
          %601 = vst [vmem:[#allocation3] sm:$0xff] 0.0
        $region48: #{tpu_custom_call.1} parent=35 // pred_fallthru
          _
        %s602 = smul.u32 %s36, 128
        %s603 = sld [smem:[#allocation5 + %s35]]
        %p604 = scmp.lt.s32.totalorder %s602, %s603
        // Predicated region
        $region49: #{tpu_custom_call.1} parent=35 // pred_check
          %p605 = pneg %p604
        $region50: #{tpu_custom_call.1} parent=35 // pred_check_branch
          %607 = sbr.rel (%p605) target = $region52
        $region51: #{tpu_custom_call.1} parent=35 // pred_region
          %v608 = vld [vmem:[#allocation2] sm:$0xff]
          %v609 = vld [vmem:[#allocation2 + $0x8] sm:$0xff]
          %v610 = vld [vmem:[#allocation2 + $0x10] sm:$0xff]
          %v611 = vld [vmem:[#allocation2 + $0x18] sm:$0xff]
          %v612 = vld [vmem:[#allocation2 + $0x20] sm:$0xff]
          %v613 = vld [vmem:[#allocation2 + $0x28] sm:$0xff]
          %v614 = vld [vmem:[#allocation2 + $0x30] sm:$0xff]
          %v615 = vld [vmem:[#allocation2 + $0x38] sm:$0xff]
          %v616 = vld [vmem:[#allocation2 + $0x40] sm:$0xff]
          %v617 = vld [vmem:[#allocation2 + $0x48] sm:$0xff]
          %v618 = vld [vmem:[#allocation2 + $0x50] sm:$0xff]
          %v619 = vld [vmem:[#allocation2 + $0x58] sm:$0xff]
          %v620 = vld [vmem:[#allocation2 + $0x60] sm:$0xff]
          %v621 = vld [vmem:[#allocation2 + $0x68] sm:$0xff]
          %v622 = vld [vmem:[#allocation2 + $0x70] sm:$0xff]
          %v623 = vld [vmem:[#allocation2 + $0x78] sm:$0xff]
          %v624 = vld [vmem:[%s305] sm:$0x1]
          %v625 = vld [vmem:[%s305 + $0x1] sm:$0x1]
          %v626 = vlaneseq
          %v627 = vshrl.u32 %v626, 7
          %v628 = vlaneseq
          %v629 = vshrl.u32 %v628, 7
          %v630 = vsub.s32 0, %v629
          %v631 = vrot.slane %v624, %v630
          %vm632 = vcmp.eq.s32.totalorder %v627, %v631
          %v633 = vsel %vm632, 1, 0
          %v634 = vcvt.s32.f32 %v633
          %v635 = vlaneseq
          %v636 = vshrl.u32 %v635, 7
          %v637 = vsub.s32 0, %v636
          %v638 = vrot.slane %v625, %v637
          %vm639 = vcmp.eq.s32.totalorder %v627, %v638
          %v640 = vsel %vm639, 1, 0
          %v641 = vcvt.s32.f32 %v640
          %vm642 = vcmask 64512
          %v644 = vsel %vm642, %v608, 0
          %v647 = vsel %vm642, %v609, 0
          %v650 = vsel %vm642, %v610, 0
          %v653 = vsel %vm642, %v611, 0
          %v656 = vsel %vm642, %v612, 0
          %v659 = vsel %vm642, %v613, 0
          %v662 = vsel %vm642, %v614, 0
          %v665 = vsel %vm642, %v615, 0
          %v668 = vsel %vm642, %v616, 0
          %v671 = vsel %vm642, %v617, 0
          %v674 = vsel %vm642, %v618, 0
          %v677 = vsel %vm642, %v619, 0
          %v680 = vsel %vm642, %v620, 0
          %v683 = vsel %vm642, %v621, 0
          %v686 = vsel %vm642, %v622, 0
          %v689 = vsel %vm642, %v623, 0
          %691 = vmatprep.subr.mxu0 0.0
          %692 = vmatpush1.msra.mxu0 0.0
          %693 = vmatprep.subr.mxu0 0.0
          %694 = vmatpush1.msra.mxu0 0.0
          %695 = vmatprep.subr.mxu0 0.0
          %696 = vmatpush1.msra.mxu0 0.0
          %697 = vmatprep.subr.mxu0 0.0
          %698 = vmatpush1.msra.mxu0 0.0
          %699 = vmatprep.subr.mxu0 0.0
          %700 = vmatpush1.msra.mxu0 0.0
          %701 = vmatprep.subr.mxu0 0.0
          %702 = vmatpush1.msra.mxu0 0.0
          %703 = vmatprep.subr.mxu0 0.0
          %704 = vmatpush1.msra.mxu0 0.0
          %705 = vmatprep.subr.mxu0 0.0
          %706 = vmatpush1.msra.mxu0 0.0
          %707 = vmatprep.subr.mxu0 0.0
          %708 = vmatpush1.msra.mxu0 0.0
          %709 = vmatprep.subr.mxu0 0.0
          %710 = vmatpush1.msra.mxu0 0.0
          %711 = vmatprep.subr.mxu0 0.0
          %712 = vmatpush1.msra.mxu0 0.0
          %713 = vmatprep.subr.mxu0 0.0
          %714 = vmatpush1.msra.mxu0 0.0
          %715 = vmatprep.subr.mxu0 0.0
          %716 = vmatpush1.msra.mxu0 0.0
          %717 = vmatprep.subr.mxu0 0.0
          %718 = vmatpush1.msra.mxu0 0.0
          %719 = vmatprep.subr.mxu0 0.0
          %720 = vmatpush1.msra.mxu0 0.0
          %721 = vmatprep.subr.mxu0 0.0
          %722 = vmatpush1.msra.mxu0 %v634
          %723 = vmatprep.subr.mxu0 0.0
          %724 = vmatpush2.msra.mxu0 0.0
          %725 = vmatprep.subr.mxu0 0.0
          %726 = vmatpush2.msra.mxu0 0.0
          %727 = vmatprep.subr.mxu0 0.0
          %728 = vmatpush2.msra.mxu0 0.0
          %729 = vmatprep.subr.mxu0 0.0
          %730 = vmatpush2.msra.mxu0 0.0
          %731 = vmatprep.subr.mxu0 0.0
          %732 = vmatpush2.msra.mxu0 0.0
          %733 = vmatprep.subr.mxu0 0.0
          %734 = vmatpush2.msra.mxu0 0.0
          %735 = vmatprep.subr.mxu0 0.0
          %736 = vmatpush2.msra.mxu0 0.0
          %737 = vmatprep.subr.mxu0 0.0
          %738 = vmatpush2.msra.mxu0 0.0
          %739 = vmatprep.subr.mxu0 0.0
          %740 = vmatpush2.msra.mxu0 0.0
          %741 = vmatprep.subr.mxu0 0.0
          %742 = vmatpush2.msra.mxu0 0.0
          %743 = vmatprep.subr.mxu0 0.0
          %744 = vmatpush2.msra.mxu0 0.0
          %745 = vmatprep.subr.mxu0 0.0
          %746 = vmatpush2.msra.mxu0 0.0
          %747 = vmatprep.subr.mxu0 0.0
          %748 = vmatpush2.msra.mxu0 0.0
          %749 = vmatprep.subr.mxu0 0.0
          %750 = vmatpush2.msra.mxu0 0.0
          %751 = vmatprep.subr.mxu0 0.0
          %752 = vmatpush2.msra.mxu0 0.0
          %753 = vmatprep.subr.mxu0 0.0
          %754 = vmatpush2.msra.mxu0 0.0
          %755 = vmatprep.mubr.f32.mxu0 0.0
          %756 = vmatmul.mubr.f32.gmra.mxu0 %v644
          %v757 = vpop.f32.mrf.mxu0
          %v758 = vadd.f32 0.0, %v757
          %v759 = vpop.f32.mrf.mxu0
          %760 = vmatprep.mubr.f32.mxu0 0.0
          %761 = vmatmul.mubr.f32.gmra.mxu0 %v647
          %v762 = vpop.f32.mrf.mxu0
          %v763 = vadd.f32 0.0, %v762
          %v764 = vpop.f32.mrf.mxu0
          %765 = vmatprep.mubr.f32.mxu0 0.0
          %766 = vmatmul.mubr.f32.gmra.mxu0 %v650
          %v767 = vpop.f32.mrf.mxu0
          %v768 = vadd.f32 0.0, %v767
          %v769 = vpop.f32.mrf.mxu0
          %770 = vmatprep.mubr.f32.mxu0 0.0
          %771 = vmatmul.mubr.f32.gmra.mxu0 %v653
          %v772 = vpop.f32.mrf.mxu0
          %v773 = vadd.f32 0.0, %v772
          %v774 = vpop.f32.mrf.mxu0
          %775 = vmatprep.mubr.f32.mxu0 0.0
          %776 = vmatmul.mubr.f32.gmra.mxu0 %v656
          %v777 = vpop.f32.mrf.mxu0
          %v778 = vadd.f32 0.0, %v777
          %v779 = vpop.f32.mrf.mxu0
          %780 = vmatprep.mubr.f32.mxu0 0.0
          %781 = vmatmul.mubr.f32.gmra.mxu0 %v659
          %v782 = vpop.f32.mrf.mxu0
          %v783 = vadd.f32 0.0, %v782
          %v784 = vpop.f32.mrf.mxu0
          %785 = vmatprep.mubr.f32.mxu0 0.0
          %786 = vmatmul.mubr.f32.gmra.mxu0 %v662
          %v787 = vpop.f32.mrf.mxu0
          %v788 = vadd.f32 0.0, %v787
          %v789 = vpop.f32.mrf.mxu0
          %790 = vmatprep.mubr.f32.mxu0 0.0
          %791 = vmatmul.mubr.f32.gmra.mxu0 %v665
          %v792 = vpop.f32.mrf.mxu0
          %v793 = vadd.f32 0.0, %v792
          %v794 = vpop.f32.mrf.mxu0
          %795 = vmatprep.mubr.f32.mxu0 0.0
          %796 = vmatmul.mubr.f32.gmra.mxu0 %v668
          %v797 = vpop.f32.mrf.mxu0
          %v798 = vadd.f32 0.0, %v797
          %v799 = vpop.f32.mrf.mxu0
          %800 = vmatprep.mubr.f32.mxu0 0.0
          %801 = vmatmul.mubr.f32.gmra.mxu0 %v671
          %v802 = vpop.f32.mrf.mxu0
          %v803 = vadd.f32 0.0, %v802
          %v804 = vpop.f32.mrf.mxu0
          %805 = vmatprep.mubr.f32.mxu0 0.0
          %806 = vmatmul.mubr.f32.gmra.mxu0 %v674
          %v807 = vpop.f32.mrf.mxu0
          %v808 = vadd.f32 0.0, %v807
          %v809 = vpop.f32.mrf.mxu0
          %810 = vmatprep.mubr.f32.mxu0 0.0
          %811 = vmatmul.mubr.f32.gmra.mxu0 %v677
          %v812 = vpop.f32.mrf.mxu0
          %v813 = vadd.f32 0.0, %v812
          %v814 = vpop.f32.mrf.mxu0
          %815 = vmatprep.mubr.f32.mxu0 0.0
          %816 = vmatmul.mubr.f32.gmra.mxu0 %v680
          %v817 = vpop.f32.mrf.mxu0
          %v818 = vadd.f32 0.0, %v817
          %v819 = vpop.f32.mrf.mxu0
          %820 = vmatprep.mubr.f32.mxu0 0.0
          %821 = vmatmul.mubr.f32.gmra.mxu0 %v683
          %v822 = vpop.f32.mrf.mxu0
          %v823 = vadd.f32 0.0, %v822
          %v824 = vpop.f32.mrf.mxu0
          %825 = vmatprep.mubr.f32.mxu0 0.0
          %826 = vmatmul.mubr.f32.gmra.mxu0 %v686
          %v827 = vpop.f32.mrf.mxu0
          %v828 = vadd.f32 0.0, %v827
          %v829 = vpop.f32.mrf.mxu0
          %830 = vmatprep.mubr.f32.mxu0 0.0
          %831 = vmatmul.mubr.f32.gmra.mxu0 %v689
          %v832 = vpop.f32.mrf.mxu0
          %v833 = vadd.f32 0.0, %v832
          %v834 = vpop.f32.mrf.mxu0
          %835 = vdwg.mxu0
          %836 = vmatprep.subr.mxu0 0.0
          %837 = vmatpush1.msra.mxu0 0.0
          %838 = vmatprep.subr.mxu0 0.0
          %839 = vmatpush1.msra.mxu0 0.0
          %840 = vmatprep.subr.mxu0 0.0
          %841 = vmatpush1.msra.mxu0 0.0
          %842 = vmatprep.subr.mxu0 0.0
          %843 = vmatpush1.msra.mxu0 0.0
          %844 = vmatprep.subr.mxu0 0.0
          %845 = vmatpush1.msra.mxu0 0.0
          %846 = vmatprep.subr.mxu0 0.0
          %847 = vmatpush1.msra.mxu0 0.0
          %848 = vmatprep.subr.mxu0 0.0
          %849 = vmatpush1.msra.mxu0 0.0
          %850 = vmatprep.subr.mxu0 0.0
          %851 = vmatpush1.msra.mxu0 0.0
          %852 = vmatprep.subr.mxu0 0.0
          %853 = vmatpush1.msra.mxu0 0.0
          %854 = vmatprep.subr.mxu0 0.0
          %855 = vmatpush1.msra.mxu0 0.0
          %856 = vmatprep.subr.mxu0 0.0
          %857 = vmatpush1.msra.mxu0 0.0
          %858 = vmatprep.subr.mxu0 0.0
          %859 = vmatpush1.msra.mxu0 0.0
          %860 = vmatprep.subr.mxu0 0.0
          %861 = vmatpush1.msra.mxu0 0.0
          %862 = vmatprep.subr.mxu0 0.0
          %863 = vmatpush1.msra.mxu0 0.0
          %864 = vmatprep.subr.mxu0 0.0
          %865 = vmatpush1.msra.mxu0 0.0
          %866 = vmatprep.subr.mxu0 0.0
          %867 = vmatpush1.msra.mxu0 %v641
          %868 = vmatprep.subr.mxu0 0.0
          %869 = vmatpush2.msra.mxu0 0.0
          %870 = vmatprep.subr.mxu0 0.0
          %871 = vmatpush2.msra.mxu0 0.0
          %872 = vmatprep.subr.mxu0 0.0
          %873 = vmatpush2.msra.mxu0 0.0
          %874 = vmatprep.subr.mxu0 0.0
          %875 = vmatpush2.msra.mxu0 0.0
          %876 = vmatprep.subr.mxu0 0.0
          %877 = vmatpush2.msra.mxu0 0.0
          %878 = vmatprep.subr.mxu0 0.0
          %879 = vmatpush2.msra.mxu0 0.0
          %880 = vmatprep.subr.mxu0 0.0
          %881 = vmatpush2.msra.mxu0 0.0
          %882 = vmatprep.subr.mxu0 0.0
          %883 = vmatpush2.msra.mxu0 0.0
          %884 = vmatprep.subr.mxu0 0.0
          %885 = vmatpush2.msra.mxu0 0.0
          %886 = vmatprep.subr.mxu0 0.0
          %887 = vmatpush2.msra.mxu0 0.0
          %888 = vmatprep.subr.mxu0 0.0
          %889 = vmatpush2.msra.mxu0 0.0
          %890 = vmatprep.subr.mxu0 0.0
          %891 = vmatpush2.msra.mxu0 0.0
          %892 = vmatprep.subr.mxu0 0.0
          %893 = vmatpush2.msra.mxu0 0.0
          %894 = vmatprep.subr.mxu0 0.0
          %895 = vmatpush2.msra.mxu0 0.0
          %896 = vmatprep.subr.mxu0 0.0
          %897 = vmatpush2.msra.mxu0 0.0
          %898 = vmatprep.subr.mxu0 0.0
          %899 = vmatpush2.msra.mxu0 0.0
          %900 = vmatprep.mubr.f32.mxu0 0.0
          %901 = vmatmul.mubr.f32.gmra.mxu0 %v644
          %v902 = vpop.f32.mrf.mxu0
          %v903 = vadd.f32 0.0, %v902
          %v904 = vpop.f32.mrf.mxu0
          %905 = vmatprep.mubr.f32.mxu0 0.0
          %906 = vmatmul.mubr.f32.gmra.mxu0 %v647
          %v907 = vpop.f32.mrf.mxu0
          %v908 = vadd.f32 0.0, %v907
          %v909 = vpop.f32.mrf.mxu0
          %910 = vmatprep.mubr.f32.mxu0 0.0
          %911 = vmatmul.mubr.f32.gmra.mxu0 %v650
          %v912 = vpop.f32.mrf.mxu0
          %v913 = vadd.f32 0.0, %v912
          %v914 = vpop.f32.mrf.mxu0
          %915 = vmatprep.mubr.f32.mxu0 0.0
          %916 = vmatmul.mubr.f32.gmra.mxu0 %v653
          %v917 = vpop.f32.mrf.mxu0
          %v918 = vadd.f32 0.0, %v917
          %v919 = vpop.f32.mrf.mxu0
          %920 = vmatprep.mubr.f32.mxu0 0.0
          %921 = vmatmul.mubr.f32.gmra.mxu0 %v656
          %v922 = vpop.f32.mrf.mxu0
          %v923 = vadd.f32 0.0, %v922
          %v924 = vpop.f32.mrf.mxu0
          %925 = vmatprep.mubr.f32.mxu0 0.0
          %926 = vmatmul.mubr.f32.gmra.mxu0 %v659
          %v927 = vpop.f32.mrf.mxu0
          %v928 = vadd.f32 0.0, %v927
          %v929 = vpop.f32.mrf.mxu0
          %930 = vmatprep.mubr.f32.mxu0 0.0
          %931 = vmatmul.mubr.f32.gmra.mxu0 %v662
          %v932 = vpop.f32.mrf.mxu0
          %v933 = vadd.f32 0.0, %v932
          %v934 = vpop.f32.mrf.mxu0
          %935 = vmatprep.mubr.f32.mxu0 0.0
          %936 = vmatmul.mubr.f32.gmra.mxu0 %v665
          %v937 = vpop.f32.mrf.mxu0
          %v938 = vadd.f32 0.0, %v937
          %v939 = vpop.f32.mrf.mxu0
          %940 = vmatprep.mubr.f32.mxu0 0.0
          %941 = vmatmul.mubr.f32.gmra.mxu0 %v668
          %v942 = vpop.f32.mrf.mxu0
          %v943 = vadd.f32 0.0, %v942
          %v944 = vpop.f32.mrf.mxu0
          %945 = vmatprep.mubr.f32.mxu0 0.0
          %946 = vmatmul.mubr.f32.gmra.mxu0 %v671
          %v947 = vpop.f32.mrf.mxu0
          %v948 = vadd.f32 0.0, %v947
          %v949 = vpop.f32.mrf.mxu0
          %950 = vmatprep.mubr.f32.mxu0 0.0
          %951 = vmatmul.mubr.f32.gmra.mxu0 %v674
          %v952 = vpop.f32.mrf.mxu0
          %v953 = vadd.f32 0.0, %v952
          %v954 = vpop.f32.mrf.mxu0
          %955 = vmatprep.mubr.f32.mxu0 0.0
          %956 = vmatmul.mubr.f32.gmra.mxu0 %v677
          %v957 = vpop.f32.mrf.mxu0
          %v958 = vadd.f32 0.0, %v957
          %v959 = vpop.f32.mrf.mxu0
          %960 = vmatprep.mubr.f32.mxu0 0.0
          %961 = vmatmul.mubr.f32.gmra.mxu0 %v680
          %v962 = vpop.f32.mrf.mxu0
          %v963 = vadd.f32 0.0, %v962
          %v964 = vpop.f32.mrf.mxu0
          %965 = vmatprep.mubr.f32.mxu0 0.0
          %966 = vmatmul.mubr.f32.gmra.mxu0 %v683
          %v967 = vpop.f32.mrf.mxu0
          %v968 = vadd.f32 0.0, %v967
          %v969 = vpop.f32.mrf.mxu0
          %970 = vmatprep.mubr.f32.mxu0 0.0
          %971 = vmatmul.mubr.f32.gmra.mxu0 %v686
          %v972 = vpop.f32.mrf.mxu0
          %v973 = vadd.f32 0.0, %v972
          %v974 = vpop.f32.mrf.mxu0
          %975 = vmatprep.mubr.f32.mxu0 0.0
          %976 = vmatmul.mubr.f32.gmra.mxu0 %v689
          %v977 = vpop.f32.mrf.mxu0
          %v978 = vadd.f32 0.0, %v977
          %v979 = vpop.f32.mrf.mxu0
          %980 = vdwg.mxu0
          %v981 = vld [vmem:[%s262 + $0x8] sm:$0xff]
          %v982 = vld [vmem:[%s262 + $0x40] sm:$0xff]
          %v983 = vld [vmem:[%s262 + $0x78] sm:$0xff]
          %v984 = vld [vmem:[%s262 + $0xb0] sm:$0xff]
          %v985 = vld [vmem:[%s262 + $0xe8] sm:$0xff]
          %v986 = vld [vmem:[%s262 + $0x120] sm:$0xff]
          %v987 = vld [vmem:[%s262 + $0x158] sm:$0xff]
          %v988 = vld [vmem:[%s262 + $0x190] sm:$0xff]
          %v989 = vld [vmem:[%s262 + $0x1c8] sm:$0xff]
          %v990 = vld [vmem:[%s262 + $0x200] sm:$0xff]
          %v991 = vld [vmem:[%s262 + $0x238] sm:$0xff]
          %v992 = vld [vmem:[%s262 + $0x270] sm:$0xff]
          %v993 = vld [vmem:[%s262 + $0x2a8] sm:$0xff]
          %v994 = vld [vmem:[%s262 + $0x2e0] sm:$0xff]
          %v995 = vld [vmem:[%s262 + $0x318] sm:$0xff]
          %v996 = vld [vmem:[%s262 + $0x350] sm:$0xff]
          %v997 = vld [vmem:[%s253] sm:$0xff]
          %v998 = vld [vmem:[%s253 + $0x8] sm:$0xff]
          %v999 = vld [vmem:[%s253 + $0x10] sm:$0xff]
          %v1000 = vld [vmem:[%s253 + $0x18] sm:$0xff]
          %v1001 = vld [vmem:[%s253 + $0x20] sm:$0xff]
          %v1002 = vld [vmem:[%s253 + $0x28] sm:$0xff]
          %v1003 = vld [vmem:[%s253 + $0x30] sm:$0xff]
          %v1004 = vld [vmem:[%s253 + $0x38] sm:$0xff]
          %v1005 = vld [vmem:[%s253 + $0x40] sm:$0xff]
          %v1006 = vld [vmem:[%s253 + $0x48] sm:$0xff]
          %v1007 = vld [vmem:[%s253 + $0x50] sm:$0xff]
          %v1008 = vld [vmem:[%s253 + $0x58] sm:$0xff]
          %v1009 = vld [vmem:[%s253 + $0x60] sm:$0xff]
          %v1010 = vld [vmem:[%s253 + $0x68] sm:$0xff]
          %v1011 = vld [vmem:[%s253 + $0x70] sm:$0xff]
          %v1012 = vld [vmem:[%s253 + $0x78] sm:$0xff]
          %1014 = vset.pattern.permute.xlu0 1
          %1015 = vperm.xlu0 %1014, %v306
          %v1016 = vpop.permute.xlu0 %1015
          %1019 = vset.pattern.permute.xlu0 1
          %1020 = vperm.xlu0 %1019, %v307
          %v1021 = vpop.permute.xlu0 %1020
          %1024 = vset.pattern.permute.xlu0 1
          %1025 = vperm.xlu0 %1024, %v308
          %v1026 = vpop.permute.xlu0 %1025
          %1029 = vset.pattern.permute.xlu0 1
          %1030 = vperm.xlu0 %1029, %v309
          %v1031 = vpop.permute.xlu0 %1030
          %1034 = vset.pattern.permute.xlu0 1
          %1035 = vperm.xlu0 %1034, %v310
          %v1036 = vpop.permute.xlu0 %1035
          %1039 = vset.pattern.permute.xlu0 1
          %1040 = vperm.xlu0 %1039, %v311
          %v1041 = vpop.permute.xlu0 %1040
          %1044 = vset.pattern.permute.xlu0 1
          %1045 = vperm.xlu0 %1044, %v312
          %v1046 = vpop.permute.xlu0 %1045
          %1049 = vset.pattern.permute.xlu0 1
          %1050 = vperm.xlu0 %1049, %v313
          %v1051 = vpop.permute.xlu0 %1050
          %1054 = vset.pattern.permute.xlu0 1
          %1055 = vperm.xlu0 %1054, %v314
          %v1056 = vpop.permute.xlu0 %1055
          %1059 = vset.pattern.permute.xlu0 1
          %1060 = vperm.xlu0 %1059, %v315
          %v1061 = vpop.permute.xlu0 %1060
          %1064 = vset.pattern.permute.xlu0 1
          %1065 = vperm.xlu0 %1064, %v316
          %v1066 = vpop.permute.xlu0 %1065
          %1069 = vset.pattern.permute.xlu0 1
          %1070 = vperm.xlu0 %1069, %v317
          %v1071 = vpop.permute.xlu0 %1070
          %1074 = vset.pattern.permute.xlu0 1
          %1075 = vperm.xlu0 %1074, %v318
          %v1076 = vpop.permute.xlu0 %1075
          %1079 = vset.pattern.permute.xlu0 1
          %1080 = vperm.xlu0 %1079, %v319
          %v1081 = vpop.permute.xlu0 %1080
          %1084 = vset.pattern.permute.xlu0 1
          %1085 = vperm.xlu0 %1084, %v320
          %v1086 = vpop.permute.xlu0 %1085
          %1089 = vset.pattern.permute.xlu0 1
          %1090 = vperm.xlu0 %1089, %v321
          %v1091 = vpop.permute.xlu0 %1090
          %1093 = vmatprep.subr.mxu0 0.0
          %1094 = vmatpush1.msra.mxu0 %v1012
          %1095 = vmatprep.subr.mxu0 0.0
          %1096 = vmatpush1.msra.mxu0 %v1011
          %1097 = vmatprep.subr.mxu0 0.0
          %1098 = vmatpush1.msra.mxu0 %v1010
          %1099 = vmatprep.subr.mxu0 0.0
          %1100 = vmatpush1.msra.mxu0 %v1009
          %1101 = vmatprep.subr.mxu0 0.0
          %1102 = vmatpush1.msra.mxu0 %v1008
          %1103 = vmatprep.subr.mxu0 0.0
          %1104 = vmatpush1.msra.mxu0 %v1007
          %1105 = vmatprep.subr.mxu0 0.0
          %1106 = vmatpush1.msra.mxu0 %v1006
          %1107 = vmatprep.subr.mxu0 0.0
          %1108 = vmatpush1.msra.mxu0 %v1005
          %1109 = vmatprep.subr.mxu0 0.0
          %1110 = vmatpush1.msra.mxu0 %v1004
          %1111 = vmatprep.subr.mxu0 0.0
          %1112 = vmatpush1.msra.mxu0 %v1003
          %1113 = vmatprep.subr.mxu0 0.0
          %1114 = vmatpush1.msra.mxu0 %v1002
          %1115 = vmatprep.subr.mxu0 0.0
          %1116 = vmatpush1.msra.mxu0 %v1001
          %1117 = vmatprep.subr.mxu0 0.0
          %1118 = vmatpush1.msra.mxu0 %v1000
          %1119 = vmatprep.subr.mxu0 0.0
          %1120 = vmatpush1.msra.mxu0 %v999
          %1121 = vmatprep.subr.mxu0 0.0
          %1122 = vmatpush1.msra.mxu0 %v998
          %1123 = vmatprep.subr.mxu0 0.0
          %1124 = vmatpush1.msra.mxu0 %v997
          %1125 = vmatprep.subr.mxu0 0.0
          %1126 = vmatpush2.msra.mxu0 0.0
          %1127 = vmatprep.subr.mxu0 0.0
          %1128 = vmatpush2.msra.mxu0 0.0
          %1129 = vmatprep.subr.mxu0 0.0
          %1130 = vmatpush2.msra.mxu0 0.0
          %1131 = vmatprep.subr.mxu0 0.0
          %1132 = vmatpush2.msra.mxu0 0.0
          %1133 = vmatprep.subr.mxu0 0.0
          %1134 = vmatpush2.msra.mxu0 0.0
          %1135 = vmatprep.subr.mxu0 0.0
          %1136 = vmatpush2.msra.mxu0 0.0
          %1137 = vmatprep.subr.mxu0 0.0
          %1138 = vmatpush2.msra.mxu0 0.0
          %1139 = vmatprep.subr.mxu0 0.0
          %1140 = vmatpush2.msra.mxu0 0.0
          %1141 = vmatprep.subr.mxu0 0.0
          %1142 = vmatpush2.msra.mxu0 0.0
          %1143 = vmatprep.subr.mxu0 0.0
          %1144 = vmatpush2.msra.mxu0 0.0
          %1145 = vmatprep.subr.mxu0 0.0
          %1146 = vmatpush2.msra.mxu0 0.0
          %1147 = vmatprep.subr.mxu0 0.0
          %1148 = vmatpush2.msra.mxu0 0.0
          %1149 = vmatprep.subr.mxu0 0.0
          %1150 = vmatpush2.msra.mxu0 0.0
          %1151 = vmatprep.subr.mxu0 0.0
          %1152 = vmatpush2.msra.mxu0 0.0
          %1153 = vmatprep.subr.mxu0 0.0
          %1154 = vmatpush2.msra.mxu0 0.0
          %1155 = vmatprep.subr.mxu0 0.0
          %1156 = vmatpush2.msra.mxu0 0.0
          %1157 = vmatprep.mubr.f32.mxu0 0.0
          %1158 = vmatmul.mubr.f32.gmra.mxu0 %v981
          %v1159 = vpop.f32.mrf.mxu0
          %v1160 = vadd.f32 %v1016, %v1159
          %v1161 = vpop.f32.mrf.mxu0
          %1162 = vmatprep.mubr.f32.mxu0 0.0
          %1163 = vmatmul.mubr.f32.gmra.mxu0 %v982
          %v1164 = vpop.f32.mrf.mxu0
          %v1165 = vadd.f32 %v1021, %v1164
          %v1166 = vpop.f32.mrf.mxu0
          %1167 = vmatprep.mubr.f32.mxu0 0.0
          %1168 = vmatmul.mubr.f32.gmra.mxu0 %v983
          %v1169 = vpop.f32.mrf.mxu0
          %v1170 = vadd.f32 %v1026, %v1169
          %v1171 = vpop.f32.mrf.mxu0
          %1172 = vmatprep.mubr.f32.mxu0 0.0
          %1173 = vmatmul.mubr.f32.gmra.mxu0 %v984
          %v1174 = vpop.f32.mrf.mxu0
          %v1175 = vadd.f32 %v1031, %v1174
          %v1176 = vpop.f32.mrf.mxu0
          %1177 = vmatprep.mubr.f32.mxu0 0.0
          %1178 = vmatmul.mubr.f32.gmra.mxu0 %v985
          %v1179 = vpop.f32.mrf.mxu0
          %v1180 = vadd.f32 %v1036, %v1179
          %v1181 = vpop.f32.mrf.mxu0
          %1182 = vmatprep.mubr.f32.mxu0 0.0
          %1183 = vmatmul.mubr.f32.gmra.mxu0 %v986
          %v1184 = vpop.f32.mrf.mxu0
          %v1185 = vadd.f32 %v1041, %v1184
          %v1186 = vpop.f32.mrf.mxu0
          %1187 = vmatprep.mubr.f32.mxu0 0.0
          %1188 = vmatmul.mubr.f32.gmra.mxu0 %v987
          %v1189 = vpop.f32.mrf.mxu0
          %v1190 = vadd.f32 %v1046, %v1189
          %v1191 = vpop.f32.mrf.mxu0
          %1192 = vmatprep.mubr.f32.mxu0 0.0
          %1193 = vmatmul.mubr.f32.gmra.mxu0 %v988
          %v1194 = vpop.f32.mrf.mxu0
          %v1195 = vadd.f32 %v1051, %v1194
          %v1196 = vpop.f32.mrf.mxu0
          %1197 = vmatprep.mubr.f32.mxu0 0.0
          %1198 = vmatmul.mubr.f32.gmra.mxu0 %v989
          %v1199 = vpop.f32.mrf.mxu0
          %v1200 = vadd.f32 %v1056, %v1199
          %v1201 = vpop.f32.mrf.mxu0
          %1202 = vmatprep.mubr.f32.mxu0 0.0
          %1203 = vmatmul.mubr.f32.gmra.mxu0 %v990
          %v1204 = vpop.f32.mrf.mxu0
          %v1205 = vadd.f32 %v1061, %v1204
          %v1206 = vpop.f32.mrf.mxu0
          %1207 = vmatprep.mubr.f32.mxu0 0.0
          %1208 = vmatmul.mubr.f32.gmra.mxu0 %v991
          %v1209 = vpop.f32.mrf.mxu0
          %v1210 = vadd.f32 %v1066, %v1209
          %v1211 = vpop.f32.mrf.mxu0
          %1212 = vmatprep.mubr.f32.mxu0 0.0
          %1213 = vmatmul.mubr.f32.gmra.mxu0 %v992
          %v1214 = vpop.f32.mrf.mxu0
          %v1215 = vadd.f32 %v1071, %v1214
          %v1216 = vpop.f32.mrf.mxu0
          %1217 = vmatprep.mubr.f32.mxu0 0.0
          %1218 = vmatmul.mubr.f32.gmra.mxu0 %v993
          %v1219 = vpop.f32.mrf.mxu0
          %v1220 = vadd.f32 %v1076, %v1219
          %v1221 = vpop.f32.mrf.mxu0
          %1222 = vmatprep.mubr.f32.mxu0 0.0
          %1223 = vmatmul.mubr.f32.gmra.mxu0 %v994
          %v1224 = vpop.f32.mrf.mxu0
          %v1225 = vadd.f32 %v1081, %v1224
          %v1226 = vpop.f32.mrf.mxu0
          %1227 = vmatprep.mubr.f32.mxu0 0.0
          %1228 = vmatmul.mubr.f32.gmra.mxu0 %v995
          %v1229 = vpop.f32.mrf.mxu0
          %v1230 = vadd.f32 %v1086, %v1229
          %v1231 = vpop.f32.mrf.mxu0
          %1232 = vmatprep.mubr.f32.mxu0 0.0
          %1233 = vmatmul.mubr.f32.gmra.mxu0 %v996
          %v1234 = vpop.f32.mrf.mxu0
          %v1235 = vadd.f32 %v1091, %v1234
          %v1236 = vpop.f32.mrf.mxu0
          %1237 = vdwg.mxu0
          %v1238 = vld [vmem:[%s262 + $0x10] sm:$0xff]
          %v1239 = vld [vmem:[%s262 + $0x18] sm:$0xff]
          %v1240 = vld [vmem:[%s262 + $0x20] sm:$0xff]
          %v1241 = vld [vmem:[%s262 + $0x48] sm:$0xff]
          %v1242 = vld [vmem:[%s262 + $0x50] sm:$0xff]
          %v1243 = vld [vmem:[%s262 + $0x58] sm:$0xff]
          %v1244 = vld [vmem:[%s262 + $0x80] sm:$0xff]
          %v1245 = vld [vmem:[%s262 + $0x88] sm:$0xff]
          %v1246 = vld [vmem:[%s262 + $0x90] sm:$0xff]
          %v1247 = vld [vmem:[%s262 + $0xb8] sm:$0xff]
          %v1248 = vld [vmem:[%s262 + $0xc0] sm:$0xff]
          %v1249 = vld [vmem:[%s262 + $0xc8] sm:$0xff]
          %v1250 = vld [vmem:[%s262 + $0xf0] sm:$0xff]
          %v1251 = vld [vmem:[%s262 + $0xf8] sm:$0xff]
          %v1252 = vld [vmem:[%s262 + $0x100] sm:$0xff]
          %v1253 = vld [vmem:[%s262 + $0x128] sm:$0xff]
          %v1254 = vld [vmem:[%s262 + $0x130] sm:$0xff]
          %v1255 = vld [vmem:[%s262 + $0x138] sm:$0xff]
          %v1256 = vld [vmem:[%s262 + $0x160] sm:$0xff]
          %v1257 = vld [vmem:[%s262 + $0x168] sm:$0xff]
          %v1258 = vld [vmem:[%s262 + $0x170] sm:$0xff]
          %v1259 = vld [vmem:[%s262 + $0x198] sm:$0xff]
          %v1260 = vld [vmem:[%s262 + $0x1a0] sm:$0xff]
          %v1261 = vld [vmem:[%s262 + $0x1a8] sm:$0xff]
          %v1262 = vld [vmem:[%s262 + $0x1d0] sm:$0xff]
          %v1263 = vld [vmem:[%s262 + $0x1d8] sm:$0xff]
          %v1264 = vld [vmem:[%s262 + $0x1e0] sm:$0xff]
          %v1265 = vld [vmem:[%s262 + $0x208] sm:$0xff]
          %v1266 = vld [vmem:[%s262 + $0x210] sm:$0xff]
          %v1267 = vld [vmem:[%s262 + $0x218] sm:$0xff]
          %v1268 = vld [vmem:[%s262 + $0x240] sm:$0xff]
          %v1269 = vld [vmem:[%s262 + $0x248] sm:$0xff]
          %v1270 = vld [vmem:[%s262 + $0x250] sm:$0xff]
          %v1271 = vld [vmem:[%s262 + $0x278] sm:$0xff]
          %v1272 = vld [vmem:[%s262 + $0x280] sm:$0xff]
          %v1273 = vld [vmem:[%s262 + $0x288] sm:$0xff]
          %v1274 = vld [vmem:[%s262 + $0x2b0] sm:$0xff]
          %v1275 = vld [vmem:[%s262 + $0x2b8] sm:$0xff]
          %v1276 = vld [vmem:[%s262 + $0x2c0] sm:$0xff]
          %v1277 = vld [vmem:[%s262 + $0x2e8] sm:$0xff]
          %v1278 = vld [vmem:[%s262 + $0x2f0] sm:$0xff]
          %v1279 = vld [vmem:[%s262 + $0x2f8] sm:$0xff]
          %v1280 = vld [vmem:[%s262 + $0x320] sm:$0xff]
          %v1281 = vld [vmem:[%s262 + $0x328] sm:$0xff]
          %v1282 = vld [vmem:[%s262 + $0x330] sm:$0xff]
          %v1283 = vld [vmem:[%s262 + $0x358] sm:$0xff]
          %v1284 = vld [vmem:[%s262 + $0x360] sm:$0xff]
          %v1285 = vld [vmem:[%s262 + $0x368] sm:$0xff]
          %1286 = vset.pattern.permute.xlu0 2
          %1287 = vperm.xlu0 %1286, %v306
          %v1288 = vpop.permute.xlu0 %1287
          %1290 = vset.pattern.permute.xlu0 2
          %1291 = vperm.xlu0 %1290, %v307
          %v1292 = vpop.permute.xlu0 %1291
          %1294 = vset.pattern.permute.xlu0 2
          %1295 = vperm.xlu0 %1294, %v308
          %v1296 = vpop.permute.xlu0 %1295
          %1298 = vset.pattern.permute.xlu0 2
          %1299 = vperm.xlu0 %1298, %v309
          %v1300 = vpop.permute.xlu0 %1299
          %1302 = vset.pattern.permute.xlu0 2
          %1303 = vperm.xlu0 %1302, %v310
          %v1304 = vpop.permute.xlu0 %1303
          %1306 = vset.pattern.permute.xlu0 2
          %1307 = vperm.xlu0 %1306, %v311
          %v1308 = vpop.permute.xlu0 %1307
          %1310 = vset.pattern.permute.xlu0 2
          %1311 = vperm.xlu0 %1310, %v312
          %v1312 = vpop.permute.xlu0 %1311
          %1314 = vset.pattern.permute.xlu0 2
          %1315 = vperm.xlu0 %1314, %v313
          %v1316 = vpop.permute.xlu0 %1315
          %1318 = vset.pattern.permute.xlu0 2
          %1319 = vperm.xlu0 %1318, %v314
          %v1320 = vpop.permute.xlu0 %1319
          %1322 = vset.pattern.permute.xlu0 2
          %1323 = vperm.xlu0 %1322, %v315
          %v1324 = vpop.permute.xlu0 %1323
          %1326 = vset.pattern.permute.xlu0 2
          %1327 = vperm.xlu0 %1326, %v316
          %v1328 = vpop.permute.xlu0 %1327
          %1330 = vset.pattern.permute.xlu0 2
          %1331 = vperm.xlu0 %1330, %v317
          %v1332 = vpop.permute.xlu0 %1331
          %1334 = vset.pattern.permute.xlu0 2
          %1335 = vperm.xlu0 %1334, %v318
          %v1336 = vpop.permute.xlu0 %1335
          %1338 = vset.pattern.permute.xlu0 2
          %1339 = vperm.xlu0 %1338, %v319
          %v1340 = vpop.permute.xlu0 %1339
          %1342 = vset.pattern.permute.xlu0 2
          %1343 = vperm.xlu0 %1342, %v320
          %v1344 = vpop.permute.xlu0 %1343
          %1346 = vset.pattern.permute.xlu0 2
          %1347 = vperm.xlu0 %1346, %v321
          %v1348 = vpop.permute.xlu0 %1347
          %1350 = vmatprep.subr.mxu0 0.0
          %1351 = vmatpush1.msra.mxu0 %v833
          %1352 = vmatprep.subr.mxu0 0.0
          %1353 = vmatpush1.msra.mxu0 %v828
          %1354 = vmatprep.subr.mxu0 0.0
          %1355 = vmatpush1.msra.mxu0 %v823
          %1356 = vmatprep.subr.mxu0 0.0
          %1357 = vmatpush1.msra.mxu0 %v818
          %1358 = vmatprep.subr.mxu0 0.0
          %1359 = vmatpush1.msra.mxu0 %v813
          %1360 = vmatprep.subr.mxu0 0.0
          %1361 = vmatpush1.msra.mxu0 %v808
          %1362 = vmatprep.subr.mxu0 0.0
          %1363 = vmatpush1.msra.mxu0 %v803
          %1364 = vmatprep.subr.mxu0 0.0
          %1365 = vmatpush1.msra.mxu0 %v798
          %1366 = vmatprep.subr.mxu0 0.0
          %1367 = vmatpush1.msra.mxu0 %v793
          %1368 = vmatprep.subr.mxu0 0.0
          %1369 = vmatpush1.msra.mxu0 %v788
          %1370 = vmatprep.subr.mxu0 0.0
          %1371 = vmatpush1.msra.mxu0 %v783
          %1372 = vmatprep.subr.mxu0 0.0
          %1373 = vmatpush1.msra.mxu0 %v778
          %1374 = vmatprep.subr.mxu0 0.0
          %1375 = vmatpush1.msra.mxu0 %v773
          %1376 = vmatprep.subr.mxu0 0.0
          %1377 = vmatpush1.msra.mxu0 %v768
          %1378 = vmatprep.subr.mxu0 0.0
          %1379 = vmatpush1.msra.mxu0 %v763
          %1380 = vmatprep.subr.mxu0 0.0
          %1381 = vmatpush1.msra.mxu0 %v758
          %1382 = vmatprep.subr.mxu0 0.0
          %1383 = vmatpush2.msra.mxu0 %v978
          %1384 = vmatprep.subr.mxu0 0.0
          %1385 = vmatpush2.msra.mxu0 %v973
          %1386 = vmatprep.subr.mxu0 0.0
          %1387 = vmatpush2.msra.mxu0 %v968
          %1388 = vmatprep.subr.mxu0 0.0
          %1389 = vmatpush2.msra.mxu0 %v963
          %1390 = vmatprep.subr.mxu0 0.0
          %1391 = vmatpush2.msra.mxu0 %v958
          %1392 = vmatprep.subr.mxu0 0.0
          %1393 = vmatpush2.msra.mxu0 %v953
          %1394 = vmatprep.subr.mxu0 0.0
          %1395 = vmatpush2.msra.mxu0 %v948
          %1396 = vmatprep.subr.mxu0 0.0
          %1397 = vmatpush2.msra.mxu0 %v943
          %1398 = vmatprep.subr.mxu0 0.0
          %1399 = vmatpush2.msra.mxu0 %v938
          %1400 = vmatprep.subr.mxu0 0.0
          %1401 = vmatpush2.msra.mxu0 %v933
          %1402 = vmatprep.subr.mxu0 0.0
          %1403 = vmatpush2.msra.mxu0 %v928
          %1404 = vmatprep.subr.mxu0 0.0
          %1405 = vmatpush2.msra.mxu0 %v923
          %1406 = vmatprep.subr.mxu0 0.0
          %1407 = vmatpush2.msra.mxu0 %v918
          %1408 = vmatprep.subr.mxu0 0.0
          %1409 = vmatpush2.msra.mxu0 %v913
          %1410 = vmatprep.subr.mxu0 0.0
          %1411 = vmatpush2.msra.mxu0 %v908
          %1412 = vmatprep.subr.mxu0 0.0
          %1413 = vmatpush2.msra.mxu0 %v903
          %1414 = vmatprep.mubr.f32.mxu0 %v1239
          %1415 = vmatmul.mubr.f32.gmra.mxu0 %v1238
          %v1416 = vpop.f32.mrf.mxu0
          %v1417 = vadd.f32 %v1288, %v1416
          %v1418 = vpop.f32.mrf.mxu0
          %1419 = vmatprep.mubr.f32.mxu0 %v1242
          %1420 = vmatmul.mubr.f32.gmra.mxu0 %v1241
          %v1421 = vpop.f32.mrf.mxu0
          %v1422 = vadd.f32 %v1292, %v1421
          %v1423 = vpop.f32.mrf.mxu0
          %1424 = vmatprep.mubr.f32.mxu0 %v1245
          %1425 = vmatmul.mubr.f32.gmra.mxu0 %v1244
          %v1426 = vpop.f32.mrf.mxu0
          %v1427 = vadd.f32 %v1296, %v1426
          %v1428 = vpop.f32.mrf.mxu0
          %1429 = vmatprep.mubr.f32.mxu0 %v1248
          %1430 = vmatmul.mubr.f32.gmra.mxu0 %v1247
          %v1431 = vpop.f32.mrf.mxu0
          %v1432 = vadd.f32 %v1300, %v1431
          %v1433 = vpop.f32.mrf.mxu0
          %1434 = vmatprep.mubr.f32.mxu0 %v1251
          %1435 = vmatmul.mubr.f32.gmra.mxu0 %v1250
          %v1436 = vpop.f32.mrf.mxu0
          %v1437 = vadd.f32 %v1304, %v1436
          %v1438 = vpop.f32.mrf.mxu0
          %1439 = vmatprep.mubr.f32.mxu0 %v1254
          %1440 = vmatmul.mubr.f32.gmra.mxu0 %v1253
          %v1441 = vpop.f32.mrf.mxu0
          %v1442 = vadd.f32 %v1308, %v1441
          %v1443 = vpop.f32.mrf.mxu0
          %1444 = vmatprep.mubr.f32.mxu0 %v1257
          %1445 = vmatmul.mubr.f32.gmra.mxu0 %v1256
          %v1446 = vpop.f32.mrf.mxu0
          %v1447 = vadd.f32 %v1312, %v1446
          %v1448 = vpop.f32.mrf.mxu0
          %1449 = vmatprep.mubr.f32.mxu0 %v1260
          %1450 = vmatmul.mubr.f32.gmra.mxu0 %v1259
          %v1451 = vpop.f32.mrf.mxu0
          %v1452 = vadd.f32 %v1316, %v1451
          %v1453 = vpop.f32.mrf.mxu0
          %1454 = vmatprep.mubr.f32.mxu0 %v1263
          %1455 = vmatmul.mubr.f32.gmra.mxu0 %v1262
          %v1456 = vpop.f32.mrf.mxu0
          %v1457 = vadd.f32 %v1320, %v1456
          %v1458 = vpop.f32.mrf.mxu0
          %1459 = vmatprep.mubr.f32.mxu0 %v1266
          %1460 = vmatmul.mubr.f32.gmra.mxu0 %v1265
          %v1461 = vpop.f32.mrf.mxu0
          %v1462 = vadd.f32 %v1324, %v1461
          %v1463 = vpop.f32.mrf.mxu0
          %1464 = vmatprep.mubr.f32.mxu0 %v1269
          %1465 = vmatmul.mubr.f32.gmra.mxu0 %v1268
          %v1466 = vpop.f32.mrf.mxu0
          %v1467 = vadd.f32 %v1328, %v1466
          %v1468 = vpop.f32.mrf.mxu0
          %1469 = vmatprep.mubr.f32.mxu0 %v1272
          %1470 = vmatmul.mubr.f32.gmra.mxu0 %v1271
          %v1471 = vpop.f32.mrf.mxu0
          %v1472 = vadd.f32 %v1332, %v1471
          %v1473 = vpop.f32.mrf.mxu0
          %1474 = vmatprep.mubr.f32.mxu0 %v1275
          %1475 = vmatmul.mubr.f32.gmra.mxu0 %v1274
          %v1476 = vpop.f32.mrf.mxu0
          %v1477 = vadd.f32 %v1336, %v1476
          %v1478 = vpop.f32.mrf.mxu0
          %1479 = vmatprep.mubr.f32.mxu0 %v1278
          %1480 = vmatmul.mubr.f32.gmra.mxu0 %v1277
          %v1481 = vpop.f32.mrf.mxu0
          %v1482 = vadd.f32 %v1340, %v1481
          %v1483 = vpop.f32.mrf.mxu0
          %1484 = vmatprep.mubr.f32.mxu0 %v1281
          %1485 = vmatmul.mubr.f32.gmra.mxu0 %v1280
          %v1486 = vpop.f32.mrf.mxu0
          %v1487 = vadd.f32 %v1344, %v1486
          %v1488 = vpop.f32.mrf.mxu0
          %1489 = vmatprep.mubr.f32.mxu0 %v1284
          %1490 = vmatmul.mubr.f32.gmra.mxu0 %v1283
          %v1491 = vpop.f32.mrf.mxu0
          %v1492 = vadd.f32 %v1348, %v1491
          %v1493 = vpop.f32.mrf.mxu0
          %1494 = vdwg.mxu0
          %1495 = vmatprep.subr.mxu0 0.0
          %1496 = vmatpush1.msra.mxu0 %v1235
          %1497 = vmatprep.subr.mxu0 0.0
          %1498 = vmatpush1.msra.mxu0 %v1230
          %1499 = vmatprep.subr.mxu0 0.0
          %1500 = vmatpush1.msra.mxu0 %v1225
          %1501 = vmatprep.subr.mxu0 0.0
          %1502 = vmatpush1.msra.mxu0 %v1220
          %1503 = vmatprep.subr.mxu0 0.0
          %1504 = vmatpush1.msra.mxu0 %v1215
          %1505 = vmatprep.subr.mxu0 0.0
          %1506 = vmatpush1.msra.mxu0 %v1210
          %1507 = vmatprep.subr.mxu0 0.0
          %1508 = vmatpush1.msra.mxu0 %v1205
          %1509 = vmatprep.subr.mxu0 0.0
          %1510 = vmatpush1.msra.mxu0 %v1200
          %1511 = vmatprep.subr.mxu0 0.0
          %1512 = vmatpush1.msra.mxu0 %v1195
          %1513 = vmatprep.subr.mxu0 0.0
          %1514 = vmatpush1.msra.mxu0 %v1190
          %1515 = vmatprep.subr.mxu0 0.0
          %1516 = vmatpush1.msra.mxu0 %v1185
          %1517 = vmatprep.subr.mxu0 0.0
          %1518 = vmatpush1.msra.mxu0 %v1180
          %1519 = vmatprep.subr.mxu0 0.0
          %1520 = vmatpush1.msra.mxu0 %v1175
          %1521 = vmatprep.subr.mxu0 0.0
          %1522 = vmatpush1.msra.mxu0 %v1170
          %1523 = vmatprep.subr.mxu0 0.0
          %1524 = vmatpush1.msra.mxu0 %v1165
          %1525 = vmatprep.subr.mxu0 0.0
          %1526 = vmatpush1.msra.mxu0 %v1160
          %1527 = vmatprep.subr.mxu0 0.0
          %1528 = vmatpush2.msra.mxu0 0.0
          %1529 = vmatprep.subr.mxu0 0.0
          %1530 = vmatpush2.msra.mxu0 0.0
          %1531 = vmatprep.subr.mxu0 0.0
          %1532 = vmatpush2.msra.mxu0 0.0
          %1533 = vmatprep.subr.mxu0 0.0
          %1534 = vmatpush2.msra.mxu0 0.0
          %1535 = vmatprep.subr.mxu0 0.0
          %1536 = vmatpush2.msra.mxu0 0.0
          %1537 = vmatprep.subr.mxu0 0.0
          %1538 = vmatpush2.msra.mxu0 0.0
          %1539 = vmatprep.subr.mxu0 0.0
          %1540 = vmatpush2.msra.mxu0 0.0
          %1541 = vmatprep.subr.mxu0 0.0
          %1542 = vmatpush2.msra.mxu0 0.0
          %1543 = vmatprep.subr.mxu0 0.0
          %1544 = vmatpush2.msra.mxu0 0.0
          %1545 = vmatprep.subr.mxu0 0.0
          %1546 = vmatpush2.msra.mxu0 0.0
          %1547 = vmatprep.subr.mxu0 0.0
          %1548 = vmatpush2.msra.mxu0 0.0
          %1549 = vmatprep.subr.mxu0 0.0
          %1550 = vmatpush2.msra.mxu0 0.0
          %1551 = vmatprep.subr.mxu0 0.0
          %1552 = vmatpush2.msra.mxu0 0.0
          %1553 = vmatprep.subr.mxu0 0.0
          %1554 = vmatpush2.msra.mxu0 0.0
          %1555 = vmatprep.subr.mxu0 0.0
          %1556 = vmatpush2.msra.mxu0 0.0
          %1557 = vmatprep.subr.mxu0 0.0
          %1558 = vmatpush2.msra.mxu0 0.0
          %1559 = vmatprep.mubr.f32.mxu0 0.0
          %1560 = vmatmul.mubr.f32.gmra.mxu0 %v1240
          %v1561 = vpop.f32.mrf.mxu0
          %v1562 = vadd.f32 %v1417, %v1561
          %v1563 = vpop.f32.mrf.mxu0
          %1564 = vmatprep.mubr.f32.mxu0 0.0
          %1565 = vmatmul.mubr.f32.gmra.mxu0 %v1243
          %v1566 = vpop.f32.mrf.mxu0
          %v1567 = vadd.f32 %v1422, %v1566
          %v1568 = vpop.f32.mrf.mxu0
          %1569 = vmatprep.mubr.f32.mxu0 0.0
          %1570 = vmatmul.mubr.f32.gmra.mxu0 %v1246
          %v1571 = vpop.f32.mrf.mxu0
          %v1572 = vadd.f32 %v1427, %v1571
          %v1573 = vpop.f32.mrf.mxu0
          %1574 = vmatprep.mubr.f32.mxu0 0.0
          %1575 = vmatmul.mubr.f32.gmra.mxu0 %v1249
          %v1576 = vpop.f32.mrf.mxu0
          %v1577 = vadd.f32 %v1432, %v1576
          %v1578 = vpop.f32.mrf.mxu0
          %1579 = vmatprep.mubr.f32.mxu0 0.0
          %1580 = vmatmul.mubr.f32.gmra.mxu0 %v1252
          %v1581 = vpop.f32.mrf.mxu0
          %v1582 = vadd.f32 %v1437, %v1581
          %v1583 = vpop.f32.mrf.mxu0
          %1584 = vmatprep.mubr.f32.mxu0 0.0
          %1585 = vmatmul.mubr.f32.gmra.mxu0 %v1255
          %v1586 = vpop.f32.mrf.mxu0
          %v1587 = vadd.f32 %v1442, %v1586
          %v1588 = vpop.f32.mrf.mxu0
          %1589 = vmatprep.mubr.f32.mxu0 0.0
          %1590 = vmatmul.mubr.f32.gmra.mxu0 %v1258
          %v1591 = vpop.f32.mrf.mxu0
          %v1592 = vadd.f32 %v1447, %v1591
          %v1593 = vpop.f32.mrf.mxu0
          %1594 = vmatprep.mubr.f32.mxu0 0.0
          %1595 = vmatmul.mubr.f32.gmra.mxu0 %v1261
          %v1596 = vpop.f32.mrf.mxu0
          %v1597 = vadd.f32 %v1452, %v1596
          %v1598 = vpop.f32.mrf.mxu0
          %1599 = vmatprep.mubr.f32.mxu0 0.0
          %1600 = vmatmul.mubr.f32.gmra.mxu0 %v1264
          %v1601 = vpop.f32.mrf.mxu0
          %v1602 = vadd.f32 %v1457, %v1601
          %v1603 = vpop.f32.mrf.mxu0
          %1604 = vmatprep.mubr.f32.mxu0 0.0
          %1605 = vmatmul.mubr.f32.gmra.mxu0 %v1267
          %v1606 = vpop.f32.mrf.mxu0
          %v1607 = vadd.f32 %v1462, %v1606
          %v1608 = vpop.f32.mrf.mxu0
          %1609 = vmatprep.mubr.f32.mxu0 0.0
          %1610 = vmatmul.mubr.f32.gmra.mxu0 %v1270
          %v1611 = vpop.f32.mrf.mxu0
          %v1612 = vadd.f32 %v1467, %v1611
          %v1613 = vpop.f32.mrf.mxu0
          %1614 = vmatprep.mubr.f32.mxu0 0.0
          %1615 = vmatmul.mubr.f32.gmra.mxu0 %v1273
          %v1616 = vpop.f32.mrf.mxu0
          %v1617 = vadd.f32 %v1472, %v1616
          %v1618 = vpop.f32.mrf.mxu0
          %1619 = vmatprep.mubr.f32.mxu0 0.0
          %1620 = vmatmul.mubr.f32.gmra.mxu0 %v1276
          %v1621 = vpop.f32.mrf.mxu0
          %v1622 = vadd.f32 %v1477, %v1621
          %v1623 = vpop.f32.mrf.mxu0
          %1624 = vmatprep.mubr.f32.mxu0 0.0
          %1625 = vmatmul.mubr.f32.gmra.mxu0 %v1279
          %v1626 = vpop.f32.mrf.mxu0
          %v1627 = vadd.f32 %v1482, %v1626
          %v1628 = vpop.f32.mrf.mxu0
          %1629 = vmatprep.mubr.f32.mxu0 0.0
          %1630 = vmatmul.mubr.f32.gmra.mxu0 %v1282
          %v1631 = vpop.f32.mrf.mxu0
          %v1632 = vadd.f32 %v1487, %v1631
          %v1633 = vpop.f32.mrf.mxu0
          %1634 = vmatprep.mubr.f32.mxu0 0.0
          %1635 = vmatmul.mubr.f32.gmra.mxu0 %v1285
          %v1636 = vpop.f32.mrf.mxu0
          %v1637 = vadd.f32 %v1492, %v1636
          %v1638 = vpop.f32.mrf.mxu0
          %1639 = vdwg.mxu0
          %v1640 = vtanh.pop %v1562
          %v1641 = vtanh.pop %v1567
          %v1642 = vtanh.pop %v1572
          %v1643 = vtanh.pop %v1577
          %v1644 = vtanh.pop %v1582
          %v1645 = vtanh.pop %v1587
          %v1646 = vtanh.pop %v1592
          %v1647 = vtanh.pop %v1597
          %v1648 = vtanh.pop %v1602
          %v1649 = vtanh.pop %v1607
          %v1650 = vtanh.pop %v1612
          %v1651 = vtanh.pop %v1617
          %v1652 = vtanh.pop %v1622
          %v1653 = vtanh.pop %v1627
          %v1654 = vtanh.pop %v1632
          %v1655 = vtanh.pop %v1637
          %1656 = vset.pattern.permute.xlu0 3
          %1657 = vperm.xlu0 %1656, %v306
          %v1658 = vpop.permute.xlu0 %1657
          %1660 = vset.pattern.permute.xlu0 3
          %1661 = vperm.xlu0 %1660, %v307
          %v1662 = vpop.permute.xlu0 %1661
          %1664 = vset.pattern.permute.xlu0 3
          %1665 = vperm.xlu0 %1664, %v308
          %v1666 = vpop.permute.xlu0 %1665
          %1668 = vset.pattern.permute.xlu0 3
          %1669 = vperm.xlu0 %1668, %v309
          %v1670 = vpop.permute.xlu0 %1669
          %1672 = vset.pattern.permute.xlu0 3
          %1673 = vperm.xlu0 %1672, %v310
          %v1674 = vpop.permute.xlu0 %1673
          %1676 = vset.pattern.permute.xlu0 3
          %1677 = vperm.xlu0 %1676, %v311
          %v1678 = vpop.permute.xlu0 %1677
          %1680 = vset.pattern.permute.xlu0 3
          %1681 = vperm.xlu0 %1680, %v312
          %v1682 = vpop.permute.xlu0 %1681
          %1684 = vset.pattern.permute.xlu0 3
          %1685 = vperm.xlu0 %1684, %v313
          %v1686 = vpop.permute.xlu0 %1685
          %1688 = vset.pattern.permute.xlu0 3
          %1689 = vperm.xlu0 %1688, %v314
          %v1690 = vpop.permute.xlu0 %1689
          %1692 = vset.pattern.permute.xlu0 3
          %1693 = vperm.xlu0 %1692, %v315
          %v1694 = vpop.permute.xlu0 %1693
          %1696 = vset.pattern.permute.xlu0 3
          %1697 = vperm.xlu0 %1696, %v316
          %v1698 = vpop.permute.xlu0 %1697
          %1700 = vset.pattern.permute.xlu0 3
          %1701 = vperm.xlu0 %1700, %v317
          %v1702 = vpop.permute.xlu0 %1701
          %1704 = vset.pattern.permute.xlu0 3
          %1705 = vperm.xlu0 %1704, %v318
          %v1706 = vpop.permute.xlu0 %1705
          %1708 = vset.pattern.permute.xlu0 3
          %1709 = vperm.xlu0 %1708, %v319
          %v1710 = vpop.permute.xlu0 %1709
          %1712 = vset.pattern.permute.xlu0 3
          %1713 = vperm.xlu0 %1712, %v320
          %v1714 = vpop.permute.xlu0 %1713
          %1716 = vset.pattern.permute.xlu0 3
          %1717 = vperm.xlu0 %1716, %v321
          %v1718 = vpop.permute.xlu0 %1717
          %v1720 = vmul.f32 %v1640, %v1658
          %v1721 = vmul.f32 %v1641, %v1662
          %v1722 = vmul.f32 %v1642, %v1666
          %v1723 = vmul.f32 %v1643, %v1670
          %v1724 = vmul.f32 %v1644, %v1674
          %v1725 = vmul.f32 %v1645, %v1678
          %v1726 = vmul.f32 %v1646, %v1682
          %v1727 = vmul.f32 %v1647, %v1686
          %v1728 = vmul.f32 %v1648, %v1690
          %v1729 = vmul.f32 %v1649, %v1694
          %v1730 = vmul.f32 %v1650, %v1698
          %v1731 = vmul.f32 %v1651, %v1702
          %v1732 = vmul.f32 %v1652, %v1706
          %v1733 = vmul.f32 %v1653, %v1710
          %v1734 = vmul.f32 %v1654, %v1714
          %v1735 = vmul.f32 %v1655, %v1718
          %v1736 = vadd.f32 %v1720, %v1721
          %v1737 = vadd.f32 %v1736, %v1722
          %v1738 = vadd.f32 %v1737, %v1723
          %v1739 = vadd.f32 %v1738, %v1724
          %v1740 = vadd.f32 %v1739, %v1725
          %v1741 = vadd.f32 %v1740, %v1726
          %v1742 = vadd.f32 %v1741, %v1727
          %v1743 = vadd.f32 %v1742, %v1728
          %v1744 = vadd.f32 %v1743, %v1729
          %v1745 = vadd.f32 %v1744, %v1730
          %v1746 = vadd.f32 %v1745, %v1731
          %v1747 = vadd.f32 %v1746, %v1732
          %v1748 = vadd.f32 %v1747, %v1733
          %v1749 = vadd.f32 %v1748, %v1734
          %v1750 = vadd.f32 %v1749, %v1735
          %v1751 = vrot.slane %v1750, 4
          %v1752 = vadd.f32 %v1750, %v1751
          %v1753 = vrot.slane %v1752, 2
          %v1754 = vadd.f32 %v1752, %v1753
          %v1755 = vrot.slane %v1754, 1
          %v1756 = vadd.f32 %v1754, %v1755
          %1758 = vset.pattern.permute.xlu0 0
          %1759 = vperm.xlu0 %1758, %v322
          %v1760 = vpop.permute.xlu0 %1759
          %v1762 = vadd.f32 %v1756, %v1760
          %v1763 = vmul.f32 %v1762, 1.442695
          %v1764 = vpow.pop %v1763
          %v1765 = vadd.s32 %v627, 8
          %v1766 = vadd.s32 %v627, 16
          %v1767 = vadd.s32 %v627, 24
          %v1768 = vadd.s32 %v627, 32
          %v1769 = vadd.s32 %v627, 40
          %v1770 = vadd.s32 %v627, 48
          %v1771 = vadd.s32 %v627, 56
          %v1772 = vadd.s32 %v627, 64
          %v1773 = vadd.s32 %v627, 72
          %v1774 = vadd.s32 %v627, 80
          %v1775 = vadd.s32 %v627, 88
          %v1776 = vadd.s32 %v627, 96
          %v1777 = vadd.s32 %v627, 104
          %v1778 = vadd.s32 %v627, 112
          %v1779 = vadd.s32 %v627, 120
          %vm1780 = vcmp.eq.s32.totalorder %v627, 32
          %vm1781 = vcmp.eq.s32.totalorder %v1765, 32
          %vm1782 = vcmp.eq.s32.totalorder %v1766, 32
          %vm1783 = vcmp.eq.s32.totalorder %v1767, 32
          %vm1784 = vcmp.eq.s32.totalorder %v1768, 32
          %vm1785 = vcmp.eq.s32.totalorder %v1769, 32
          %vm1786 = vcmp.eq.s32.totalorder %v1770, 32
          %vm1787 = vcmp.eq.s32.totalorder %v1771, 32
          %vm1788 = vcmp.eq.s32.totalorder %v1772, 32
          %vm1789 = vcmp.eq.s32.totalorder %v1773, 32
          %vm1790 = vcmp.eq.s32.totalorder %v1774, 32
          %vm1791 = vcmp.eq.s32.totalorder %v1775, 32
          %vm1792 = vcmp.eq.s32.totalorder %v1776, 32
          %vm1793 = vcmp.eq.s32.totalorder %v1777, 32
          %vm1794 = vcmp.eq.s32.totalorder %v1778, 32
          %vm1795 = vcmp.eq.s32.totalorder %v1779, 32
          %v1796 = vlaneseq
          %v1797 = vshrl.u32 %v1796, 7
          %v1798 = vsub.s32 3, %v1797
          %v1799 = vrot.slane %v1764, %v1798
          %v1800 = vmul.f32 %v903, %v1799
          %v1801 = vmul.f32 %v908, %v1799
          %v1802 = vmul.f32 %v913, %v1799
          %v1803 = vmul.f32 %v918, %v1799
          %v1804 = vmul.f32 %v923, %v1799
          %v1805 = vmul.f32 %v928, %v1799
          %v1806 = vmul.f32 %v933, %v1799
          %v1807 = vmul.f32 %v938, %v1799
          %v1808 = vmul.f32 %v943, %v1799
          %v1809 = vmul.f32 %v948, %v1799
          %v1810 = vmul.f32 %v953, %v1799
          %v1811 = vmul.f32 %v958, %v1799
          %v1812 = vmul.f32 %v963, %v1799
          %v1813 = vmul.f32 %v968, %v1799
          %v1814 = vmul.f32 %v973, %v1799
          %v1815 = vmul.f32 %v978, %v1799
          %v1816 = vsel %vm1780, %v1799, %v1800
          %v1817 = vsel %vm1781, %v1799, %v1801
          %v1818 = vsel %vm1782, %v1799, %v1802
          %v1819 = vsel %vm1783, %v1799, %v1803
          %v1820 = vsel %vm1784, %v1799, %v1804
          %v1821 = vsel %vm1785, %v1799, %v1805
          %v1822 = vsel %vm1786, %v1799, %v1806
          %v1823 = vsel %vm1787, %v1799, %v1807
          %v1824 = vsel %vm1788, %v1799, %v1808
          %v1825 = vsel %vm1789, %v1799, %v1809
          %v1826 = vsel %vm1790, %v1799, %v1810
          %v1827 = vsel %vm1791, %v1799, %v1811
          %v1828 = vsel %vm1792, %v1799, %v1812
          %v1829 = vsel %vm1793, %v1799, %v1813
          %v1830 = vsel %vm1794, %v1799, %v1814
          %v1831 = vsel %vm1795, %v1799, %v1815
          %v1832 = vld [vmem:[#allocation3] sm:$0xff]
          %1833 = vmatprep.subr.mxu0 0.0
          %1834 = vmatpush1.xpose.msra.mxu0 %v1831
          %1835 = vmatprep.subr.mxu0 0.0
          %1836 = vmatpush1.xpose.msra.mxu0 %v1830
          %1837 = vmatprep.subr.mxu0 0.0
          %1838 = vmatpush1.xpose.msra.mxu0 %v1829
          %1839 = vmatprep.subr.mxu0 0.0
          %1840 = vmatpush1.xpose.msra.mxu0 %v1828
          %1841 = vmatprep.subr.mxu0 0.0
          %1842 = vmatpush1.xpose.msra.mxu0 %v1827
          %1843 = vmatprep.subr.mxu0 0.0
          %1844 = vmatpush1.xpose.msra.mxu0 %v1826
          %1845 = vmatprep.subr.mxu0 0.0
          %1846 = vmatpush1.xpose.msra.mxu0 %v1825
          %1847 = vmatprep.subr.mxu0 0.0
          %1848 = vmatpush1.xpose.msra.mxu0 %v1824
          %1849 = vmatprep.subr.mxu0 0.0
          %1850 = vmatpush1.xpose.msra.mxu0 %v1823
          %1851 = vmatprep.subr.mxu0 0.0
          %1852 = vmatpush1.xpose.msra.mxu0 %v1822
          %1853 = vmatprep.subr.mxu0 0.0
          %1854 = vmatpush1.xpose.msra.mxu0 %v1821
          %1855 = vmatprep.subr.mxu0 0.0
          %1856 = vmatpush1.xpose.msra.mxu0 %v1820
          %1857 = vmatprep.subr.mxu0 0.0
          %1858 = vmatpush1.xpose.msra.mxu0 %v1819
          %1859 = vmatprep.subr.mxu0 0.0
          %1860 = vmatpush1.xpose.msra.mxu0 %v1818
          %1861 = vmatprep.subr.mxu0 0.0
          %1862 = vmatpush1.xpose.msra.mxu0 %v1817
          %1863 = vmatprep.subr.mxu0 0.0
          %1864 = vmatpush1.xpose.msra.mxu0 %v1816
          %1865 = vmatprep.subr.mxu0 0.0
          %1866 = vmatpush2.xpose.msra.mxu0 0.0
          %1867 = vmatprep.subr.mxu0 0.0
          %1868 = vmatpush2.xpose.msra.mxu0 0.0
          %1869 = vmatprep.subr.mxu0 0.0
          %1870 = vmatpush2.xpose.msra.mxu0 0.0
          %1871 = vmatprep.subr.mxu0 0.0
          %1872 = vmatpush2.xpose.msra.mxu0 0.0
          %1873 = vmatprep.subr.mxu0 0.0
          %1874 = vmatpush2.xpose.msra.mxu0 0.0
          %1875 = vmatprep.subr.mxu0 0.0
          %1876 = vmatpush2.xpose.msra.mxu0 0.0
          %1877 = vmatprep.subr.mxu0 0.0
          %1878 = vmatpush2.xpose.msra.mxu0 0.0
          %1879 = vmatprep.subr.mxu0 0.0
          %1880 = vmatpush2.xpose.msra.mxu0 0.0
          %1881 = vmatprep.subr.mxu0 0.0
          %1882 = vmatpush2.xpose.msra.mxu0 0.0
          %1883 = vmatprep.subr.mxu0 0.0
          %1884 = vmatpush2.xpose.msra.mxu0 0.0
          %1885 = vmatprep.subr.mxu0 0.0
          %1886 = vmatpush2.xpose.msra.mxu0 0.0
          %1887 = vmatprep.subr.mxu0 0.0
          %1888 = vmatpush2.xpose.msra.mxu0 0.0
          %1889 = vmatprep.subr.mxu0 0.0
          %1890 = vmatpush2.xpose.msra.mxu0 0.0
          %1891 = vmatprep.subr.mxu0 0.0
          %1892 = vmatpush2.xpose.msra.mxu0 0.0
          %1893 = vmatprep.subr.mxu0 0.0
          %1894 = vmatpush2.xpose.msra.mxu0 0.0
          %1895 = vmatprep.subr.mxu0 0.0
          %1896 = vmatpush2.xpose.msra.mxu0 0.0
          %1897 = vmatprep.mubr.f32.mxu0 0.0
          %1898 = vmatmul.mubr.f32.gmra.mxu0 %v634
          %v1899 = vpop.f32.mrf.mxu0
          %v1900 = vadd.f32 0.0, %v1899
          %v1901 = vpop.f32.mrf.mxu0
          %1902 = vdwg.mxu0
          %v1903 = vadd.f32 %v1832, %v1900
          %1904 = vst [vmem:[#allocation3] sm:$0xff] %v1903
        $region52: #{tpu_custom_call.1} parent=35 // pred_fallthru
          _
        // Predicated region
        $region53: #{tpu_custom_call.1} parent=35 // pred_check
          %p1905 = pneg %p323
        $region54: #{tpu_custom_call.1} parent=35 // pred_check_branch
          %1907 = sbr.rel (%p1905) target = $region56
        $region55: #{tpu_custom_call.1} parent=35 // pred_region
          %v1908 = vld [vmem:[#allocation3] sm:$0xff]
          %vm1909 = vcmp.gt.f32.partialorder %v1908, 0.0
          %v1910 = vsel %vm1909, %v1908, 1.0
          %v1911 = vrcp.pop %v1910
          %1913 = vset.pattern.permute.xlu0 32
          %1914 = vperm.xlu0 %1913, %v1911
          %v1915 = vpop.permute.xlu0 %1914
          %v1917 = vmul.f32 %v1908, %v1915
          %v1918 = vld [vmem:[%s262 + $0x28] sm:$0xff]
          %v1919 = vld [vmem:[%s262 + $0x60] sm:$0xff]
          %v1920 = vld [vmem:[%s262 + $0x98] sm:$0xff]
          %v1921 = vld [vmem:[%s262 + $0xd0] sm:$0xff]
          %v1922 = vld [vmem:[%s262 + $0x108] sm:$0xff]
          %v1923 = vld [vmem:[%s262 + $0x140] sm:$0xff]
          %v1924 = vld [vmem:[%s262 + $0x178] sm:$0xff]
          %v1925 = vld [vmem:[%s262 + $0x1b0] sm:$0xff]
          %v1926 = vld [vmem:[%s262 + $0x1e8] sm:$0xff]
          %v1927 = vld [vmem:[%s262 + $0x220] sm:$0xff]
          %v1928 = vld [vmem:[%s262 + $0x258] sm:$0xff]
          %v1929 = vld [vmem:[%s262 + $0x290] sm:$0xff]
          %v1930 = vld [vmem:[%s262 + $0x2c8] sm:$0xff]
          %v1931 = vld [vmem:[%s262 + $0x300] sm:$0xff]
          %v1932 = vld [vmem:[%s262 + $0x338] sm:$0xff]
          %v1933 = vld [vmem:[%s262 + $0x370] sm:$0xff]
          %v1934 = vlaneseq
          %v1935 = vshrl.u32 %v1934, 7
          %v1936 = vsub.s32 0, %v1935
          %v1937 = vrot.slane %v322, %v1936
          %1938 = vmatprep.subr.mxu0 0.0
          %1939 = vmatpush1.msra.mxu0 %v1933
          %1940 = vmatprep.subr.mxu0 0.0
          %1941 = vmatpush1.msra.mxu0 %v1932
          %1942 = vmatprep.subr.mxu0 0.0
          %1943 = vmatpush1.msra.mxu0 %v1931
          %1944 = vmatprep.subr.mxu0 0.0
          %1945 = vmatpush1.msra.mxu0 %v1930
          %1946 = vmatprep.subr.mxu0 0.0
          %1947 = vmatpush1.msra.mxu0 %v1929
          %1948 = vmatprep.subr.mxu0 0.0
          %1949 = vmatpush1.msra.mxu0 %v1928
          %1950 = vmatprep.subr.mxu0 0.0
          %1951 = vmatpush1.msra.mxu0 %v1927
          %1952 = vmatprep.subr.mxu0 0.0
          %1953 = vmatpush1.msra.mxu0 %v1926
          %1954 = vmatprep.subr.mxu0 0.0
          %1955 = vmatpush1.msra.mxu0 %v1925
          %1956 = vmatprep.subr.mxu0 0.0
          %1957 = vmatpush1.msra.mxu0 %v1924
          %1958 = vmatprep.subr.mxu0 0.0
          %1959 = vmatpush1.msra.mxu0 %v1923
          %1960 = vmatprep.subr.mxu0 0.0
          %1961 = vmatpush1.msra.mxu0 %v1922
          %1962 = vmatprep.subr.mxu0 0.0
          %1963 = vmatpush1.msra.mxu0 %v1921
          %1964 = vmatprep.subr.mxu0 0.0
          %1965 = vmatpush1.msra.mxu0 %v1920
          %1966 = vmatprep.subr.mxu0 0.0
          %1967 = vmatpush1.msra.mxu0 %v1919
          %1968 = vmatprep.subr.mxu0 0.0
          %1969 = vmatpush1.msra.mxu0 %v1918
          %1970 = vmatprep.subr.mxu0 0.0
          %1971 = vmatpush2.msra.mxu0 0.0
          %1972 = vmatprep.subr.mxu0 0.0
          %1973 = vmatpush2.msra.mxu0 0.0
          %1974 = vmatprep.subr.mxu0 0.0
          %1975 = vmatpush2.msra.mxu0 0.0
          %1976 = vmatprep.subr.mxu0 0.0
          %1977 = vmatpush2.msra.mxu0 0.0
          %1978 = vmatprep.subr.mxu0 0.0
          %1979 = vmatpush2.msra.mxu0 0.0
          %1980 = vmatprep.subr.mxu0 0.0
          %1981 = vmatpush2.msra.mxu0 0.0
          %1982 = vmatprep.subr.mxu0 0.0
          %1983 = vmatpush2.msra.mxu0 0.0
          %1984 = vmatprep.subr.mxu0 0.0
          %1985 = vmatpush2.msra.mxu0 0.0
          %1986 = vmatprep.subr.mxu0 0.0
          %1987 = vmatpush2.msra.mxu0 0.0
          %1988 = vmatprep.subr.mxu0 0.0
          %1989 = vmatpush2.msra.mxu0 0.0
          %1990 = vmatprep.subr.mxu0 0.0
          %1991 = vmatpush2.msra.mxu0 0.0
          %1992 = vmatprep.subr.mxu0 0.0
          %1993 = vmatpush2.msra.mxu0 0.0
          %1994 = vmatprep.subr.mxu0 0.0
          %1995 = vmatpush2.msra.mxu0 0.0
          %1996 = vmatprep.subr.mxu0 0.0
          %1997 = vmatpush2.msra.mxu0 0.0
          %1998 = vmatprep.subr.mxu0 0.0
          %1999 = vmatpush2.msra.mxu0 0.0
          %2000 = vmatprep.subr.mxu0 0.0
          %2001 = vmatpush2.msra.mxu0 0.0
          %2002 = vmatprep.mubr.f32.mxu0 0.0
          %2003 = vmatmul.mubr.f32.gmra.mxu0 %v1917
          %v2004 = vpop.f32.mrf.mxu0
          %v2005 = vadd.f32 %v1937, %v2004
          %v2006 = vpop.f32.mrf.mxu0
          %2007 = vdwg.mxu0
          %2008 = vadd.xlane.f32.xlu0 %v2005
          %v2009 = vpop.xlane.xlu0 %2008
          %v2010 = vmul.f32 %v2009, 0.03125
          %v2011 = vmul.f32 %v2005, %v2005
          %2012 = vadd.xlane.f32.xlu0 %v2011
          %v2013 = vpop.xlane.xlu0 %2012
          %v2014 = vmul.f32 %v2013, 0.03125
          %v2015 = vmul.f32 %v2010, %v2010
          %v2016 = vsub.f32 %v2014, %v2015
          %v2017 = vsub.f32 %v2005, %v2010
          %v2018 = vadd.f32 %v2016, 1e-05
          %v2019 = vrsqrt.pop %v2018
          %v2020 = vmul.f32 %v2017, %v2019
          %v2021 = vlaneseq
          %v2022 = vshrl.u32 %v2021, 7
          %v2023 = vsub.s32 1, %v2022
          %v2024 = vrot.slane %v322, %v2023
          %v2025 = vmul.f32 %v2020, %v2024
          %v2026 = vlaneseq
          %v2027 = vshrl.u32 %v2026, 7
          %v2028 = vsub.s32 2, %v2027
          %v2029 = vrot.slane %v322, %v2028
          %v2030 = vadd.f32 %v2025, %v2029
          %v2031 = vmax.f32 %v2030, 0.0
          %vm2032 = vcmask 261120
          %2033 = vst.msk [vmem:[%s298] sm:$0xff] %vm2032, %v2031
        $region56: #{tpu_custom_call.1} parent=35 // pred_fallthru
          _
        %s2034 = sand.u32 %s154, 1
        %s2035 = scalar_lea.sflag [#allocation8], %s2034
        %s2036 = sand.u32 %s154, 1
        %s2037 = smul.addr %s2036, 8
        %s2038 = scalar_lea.vmem [#allocation11], %s2037
        // Predicated region
        $region57: #{tpu_custom_call.1} parent=35 // pred_check
          %p2039 = pneg %p164
        $region58: #{tpu_custom_call.1} parent=35 // pred_check_branch
          %2041 = sbr.rel (%p2039) target = $region60
        $region59: #{tpu_custom_call.1} parent=35 // pred_region
          %s2043 = ssub.s32 128, 128
          %2044 = vsyncadd %s2035, %s2043
          %s2045 = smul.addr %s35, 128
          %s2046 = scalar_lea.hbm %s5, %s2045
          %s2048 = sshll.u32 %s2038, 4
          %s2049 = int_to_ptr.vmem [resolvable:$true] %s2048
          %2051 = dma.vmem_to_hbm [thread:$0]  %s2049, 128, %s2046, %s2035
        $region60: #{tpu_custom_call.1} parent=35 // pred_fallthru
          _
      $region36: #{tpu_custom_call.1} parent=5 // pred_fallthru
        _
      %p2052 = scmp.le.s32.totalorder 2, %s26
      // Predicated region
      $region61: #{tpu_custom_call.1} parent=5 // pred_check
        %p2053 = pneg %p2052
      $region62: #{tpu_custom_call.1} parent=5 // pred_check_branch
        %2055 = sbr.rel (%p2053) target = $region64
      $region63: #{tpu_custom_call.1} parent=5 // pred_region
        %s2056 = ssub.s32 %s26, 2
        // Predicated region
        $region65: #{tpu_custom_call.1} parent=63 // pred_check
          %p2057 = pneg %p170
        $region66: #{tpu_custom_call.1} parent=63 // pred_check_branch
          %2059 = sbr.rel (%p2057) target = $region68
        $region67: #{tpu_custom_call.1} parent=63 // pred_region
          %s2060 = sand.u32 %s155, 1
          %s2061 = scalar_lea.sflag [#allocation8], %s2060
          %s2062 = sand.u32 %s155, 1
          %s2063 = smul.addr %s2062, 8
          %s2064 = scalar_lea.vmem [#allocation11], %s2063
          %2065 = dma.done %s2061, 128
        $region68: #{tpu_custom_call.1} parent=63 // pred_fallthru
          _
      $region64: #{tpu_custom_call.1} parent=5 // pred_fallthru
        _
    $region6: #{tpu_custom_call.1} parent=1 // loop_footer
      %s30 = sadd.s32 1, %s26
    $region7: #{tpu_custom_call.1} parent=1 // loop_footer_branch
      %25 = sbr.rel target = $region3
    $region8: #{tpu_custom_call.1} parent=1 // loop_exit
      _
    %2066 = vsyncpa [#allocation7], 1
    %s2067 = scalar_lea.sflag [#allocation7], 1
    %2068 = vsyncpa %s2067, 1
    %2069 = vsyncpa [#allocation10], 1
    %s2070 = scalar_lea.sflag [#allocation10], 1
    %2071 = vsyncpa %s2070, 1
    %2072 = vsyncpa [#allocation8], 1
    %s2073 = scalar_lea.sflag [#allocation8], 1
    %2074 = vsyncpa %s2073, 1

</llo_original>
